<compile_context>
chip_gen: v7x
topology: tpu7x:2x2x1
jax: 0.10.0
libtpu: 0.0.40
codegen_flags: <defaults>
</compile_context>

<pallas_src>
import math
import functools

import jax
import jax.numpy as jnp
from jax.experimental import pallas as pl
from jax.experimental.pallas import tpu as pltpu


# ----------------------------- in-kernel math helpers -----------------------------

def _gelu(x):
    # tanh-approximate GELU (EUP tanh); deviates from torch's exact-erf GELU by <~1e-3.
    c = math.sqrt(2.0 / math.pi)
    return 0.5 * x * (1.0 + jnp.tanh(c * (x + 0.044715 * x * x * x)))


def _layernorm(x, w, b, eps=1e-6):
    mu = jnp.mean(x, axis=-1, keepdims=True)
    var = jnp.mean((x - mu) ** 2, axis=-1, keepdims=True)
    return (x - mu) * jax.lax.rsqrt(var + eps) * w + b


# ----------------------------- Pallas kernels -----------------------------

def _patch_embed_kernel(p_ref, w_ref, b_ref, o_ref):
    # (tm, K) @ (K, D) + (1, D); bf16 operands, f32 accumulate.
    o_ref[...] = (
        jnp.dot(p_ref[...].astype(jnp.bfloat16), w_ref[...],
                preferred_element_type=jnp.float32)
        + b_ref[...]
    )


def _encoder_layers_kernel(
    x_ref, ln1w_ref, ln1b_ref, wqkv_ref, bqkv_ref, wout_ref, bout_ref,
    ln2w_ref, ln2b_ref, w1_ref, b1_ref, w2_ref, b2_ref, o_ref, act_ref, *, num_heads
):
    """One (batch-element, layer) grid step.

    grid = (N, L); layer axis is innermost / 'arbitrary'. The running activation for
    the current batch element lives in act_ref (VMEM, f32) across layer steps; the
    per-layer weights stream in via the layer-indexed BlockSpecs.
    """
    l = pl.program_id(1)
    n_layers = pl.num_programs(1)

    @pl.when(l == 0)
    def _():
        act_ref[...] = x_ref[0]

    x = act_ref[...]                      # (S, D) f32
    S, D = x.shape
    H = num_heads
    hd = D // H
    scale = 1.0 / math.sqrt(hd)
    bf16 = jnp.bfloat16

    # --- pre-LN + multi-head self-attention (head axis as a leading batch dim) ---
    xn = _layernorm(x, ln1w_ref[0], ln1b_ref[0])                    # (S, D) f32
    xh = jnp.broadcast_to(xn.astype(bf16)[None], (H, S, D))         # (H, S, D) bf16
    # fused per-head QKV projection: (H,S,D) @ (H,D,3hd) -> (H,S,3hd)
    qkv = jnp.einsum("hsd,hdf->hsf", xh, wqkv_ref[0],
                     preferred_element_type=jnp.float32) + bqkv_ref[0]
    q, k, v = qkv[:, :, :hd], qkv[:, :, hd:2 * hd], qkv[:, :, 2 * hd:]

    s = jnp.einsum("hqd,hkd->hqk", q.astype(bf16), k.astype(bf16),
                   preferred_element_type=jnp.float32) * scale       # (H, S, S)
    s = s - jnp.max(s, axis=-1, keepdims=True)
    p = jnp.exp(s)
    p = p * pl.reciprocal(jnp.sum(p, axis=-1, keepdims=True), approx=True)

    o = jnp.einsum("hqk,hkd->hqd", p.astype(bf16), v.astype(bf16),
                   preferred_element_type=jnp.float32)               # (H, S, hd)
    # out-projection: batched per-head (S,hd)@(hd,D) then sum over heads
    # (algebraically equal to concat_heads @ W_out; avoids in-kernel transposes)
    proj = jnp.einsum("hsd,hdf->hsf", o.astype(bf16), wout_ref[0],
                      preferred_element_type=jnp.float32)            # (H, S, D)
    attn = jnp.sum(proj, axis=0) + bout_ref[0]                       # (S, D)

    x2 = x + attn                          # residual 1 (dropout rate 0 -> identity)

    # --- pre-LN + MLP (GELU) ---
    yn = _layernorm(x2, ln2w_ref[0], ln2b_ref[0])
    h1 = jnp.dot(yn.astype(bf16), w1_ref[0],
                 preferred_element_type=jnp.float32) + b1_ref[0]
    h1 = _gelu(h1)
    h2 = jnp.dot(h1.astype(bf16), w2_ref[0],
                 preferred_element_type=jnp.float32) + b2_ref[0]

    y = x2 + h2                            # residual 2
    act_ref[...] = y

    @pl.when(l == n_layers - 1)
    def _():
        o_ref[0] = y


def _layernorm_kernel(x_ref, w_ref, b_ref, o_ref):
    o_ref[...] = _layernorm(x_ref[...], w_ref[...], b_ref[...])


# ----------------------------- wrappers -----------------------------

def patch_embed(patches2d, w_bf16, b, *, tm=256):
    M, K = patches2d.shape
    D = w_bf16.shape[1]
    tm = min(tm, M)
    return pl.pallas_call(
        _patch_embed_kernel,
        grid=(pl.cdiv(M, tm),),
        in_specs=[
            pl.BlockSpec((tm, K), lambda i: (i, 0)),
            pl.BlockSpec((K, D), lambda i: (0, 0)),
            pl.BlockSpec((1, D), lambda i: (0, 0)),
        ],
        out_specs=pl.BlockSpec((tm, D), lambda i: (i, 0)),
        out_shape=jax.ShapeDtypeStruct((M, D), jnp.float32),
        compiler_params=pltpu.CompilerParams(dimension_semantics=("parallel",)),
    )(patches2d, w_bf16, b)


_LAYER_PARAM_ORDER = (
    "ln1w", "ln1b", "wqkv", "bqkv", "wout", "bout",
    "ln2w", "ln2b", "w1", "b1", "w2", "b2",
)


def encoder(x, enc, num_heads):
    """All encoder layers in one pallas_call; grid=(batch, layer)."""
    N, S, D = x.shape
    arrays = [enc[k] for k in _LAYER_PARAM_ORDER]
    L = arrays[0].shape[0]

    def layer_spec(a):
        ndim = a.ndim
        return pl.BlockSpec((1,) + a.shape[1:],
                            lambda n, l: (l,) + (0,) * (ndim - 1))

    in_specs = [pl.BlockSpec((1, S, D), lambda n, l: (n, 0, 0))] + [
        layer_spec(a) for a in arrays
    ]
    kernel = functools.partial(_encoder_layers_kernel, num_heads=num_heads)
    return pl.pallas_call(
        kernel,
        grid=(N, L),
        in_specs=in_specs,
        out_specs=pl.BlockSpec((1, S, D), lambda n, l: (n, 0, 0)),
        out_shape=jax.ShapeDtypeStruct((N, S, D), jnp.float32),
        scratch_shapes=[pltpu.VMEM((S, D), jnp.float32)],
        compiler_params=pltpu.CompilerParams(
            dimension_semantics=("parallel", "arbitrary")),
    )(x, *arrays)


def layernorm_rows(x2d, w, b):
    return pl.pallas_call(
        _layernorm_kernel,
        out_shape=jax.ShapeDtypeStruct(x2d.shape, jnp.float32),
    )(x2d, w, b)


# ----------------------------- parameter init (deterministic, synthetic) -----------------------------

def init_params(key, *, in_channels, patch_size, hidden_dim, mlp_dim, num_layers,
                num_heads, seq_length):
    K = in_channels * patch_size * patch_size
    D, M, H = hidden_dim, mlp_dim, num_heads
    hd = D // H
    keys = jax.random.split(key, 2 + num_layers)

    def xavier(k, shape):
        return jax.random.normal(k, shape, jnp.float32) * math.sqrt(2.0 / (shape[0] + shape[1]))

    params = {
        # conv_proj: lecun-normal weight (fan_in = C*p*p), zero bias; weight stored bf16
        "conv_w": (jax.random.normal(keys[0], (K, D), jnp.float32)
                   * math.sqrt(1.0 / K)).astype(jnp.bfloat16),
        "conv_b": jnp.zeros((1, D), jnp.float32),
        # encoder pos embedding (std=0.02), class token zeros
        "pos": jax.random.normal(keys[1], (seq_length, D), jnp.float32) * 0.02,
        "cls": jnp.zeros((1, 1, D), jnp.float32),
        # final LayerNorm
        "ln_w": jnp.ones((1, D), jnp.float32),
        "ln_b": jnp.zeros((1, D), jnp.float32),
    }

    per_layer = {k: [] for k in _LAYER_PARAM_ORDER}
    for i in range(num_layers):
        lk = jax.random.split(keys[2 + i], 6)
        # logical layouts (as in torch): wqkv (D, 3D) with cols [Q|K|V]; wout (D, D)
        wqkv = xavier(lk[0], (D, 3 * D))
        bqkv = jnp.zeros((3 * D,), jnp.float32)
        wout = xavier(lk[1], (D, D))
        # per-head layouts consumed by the kernel
        wqkv_h = wqkv.reshape(D, 3, H, hd).transpose(2, 0, 1, 3).reshape(H, D, 3 * hd)
        bqkv_h = bqkv.reshape(3, H, hd).transpose(1, 0, 2).reshape(H, 1, 3 * hd)
        wout_h = wout.reshape(H, hd, D)

        per_layer["ln1w"].append(jnp.ones((1, D), jnp.float32))
        per_layer["ln1b"].append(jnp.zeros((1, D), jnp.float32))
        per_layer["wqkv"].append(wqkv_h.astype(jnp.bfloat16))
        per_layer["bqkv"].append(bqkv_h)
        per_layer["wout"].append(wout_h.astype(jnp.bfloat16))
        per_layer["bout"].append(jnp.zeros((1, D), jnp.float32))
        per_layer["ln2w"].append(jnp.ones((1, D), jnp.float32))
        per_layer["ln2b"].append(jnp.zeros((1, D), jnp.float32))
        per_layer["w1"].append(xavier(lk[2], (D, M)).astype(jnp.bfloat16))
        per_layer["b1"].append(jax.random.normal(lk[3], (1, M), jnp.float32) * 1e-6)
        per_layer["w2"].append(xavier(lk[4], (M, D)).astype(jnp.bfloat16))
        per_layer["b2"].append(jax.random.normal(lk[5], (1, D), jnp.float32) * 1e-6)

    params["enc"] = {k: jnp.stack(v, axis=0) for k, v in per_layer.items()}
    return params


# ----------------------------- full forward -----------------------------

def vit_forward(x, params, *, patch_size, num_heads):
    N, C, H, W = x.shape
    p = patch_size
    nh, nw = H // p, W // p
    D = params["conv_w"].shape[1]

    # im2col: non-overlapping p x p patches, channel-major inside a patch
    # (matches Conv2d weight layout; conv with kernel=stride=patch is this matmul)
    patches = (
        x.reshape(N, C, nh, p, nw, p)
         .transpose(0, 2, 4, 1, 3, 5)
         .reshape(N * nh * nw, C * p * p)
    )
    emb = patch_embed(patches, params["conv_w"], params["conv_b"]).reshape(N, nh * nw, D)

    # classifier == 'token': prepend class token; add pos embedding (dropout 0 -> identity)
    cls = jnp.broadcast_to(params["cls"], (N, 1, D))
    xseq = jnp.concatenate([cls, emb], axis=1)              # (N, S, D)
    xseq = xseq + params["pos"][None, :, :]

    # all transformer layers in one fused pallas_call
    xseq = encoder(xseq, params["enc"], num_heads)

    # final LayerNorm only on the class-token row (row-local => identical to LN(all)[:,0])
    xcls = xseq[:, 0, :]                                    # (N, D)
    xcls = layernorm_rows(xcls, params["ln_w"], params["ln_b"])

    # trunk_output = Identity; head = None (num_classes=None)
    return xcls


# ----------------------------- main -----------------------------

if __name__ == "__main__":
    # Small config consistent with the module's forward: input_channels fixed at 3.
    batch = 2
    image_size = 16
    patch_size = 8
    num_layers = 2
    num_heads = 2
    hidden_dim = 32
    mlp_dim = 64
    seq_length = (image_size // patch_size) ** 2 + 1   # +1 class token

    key = jax.random.PRNGKey(0)
    k_x, k_p = jax.random.split(key)
    x = jax.random.normal(k_x, (batch, 3, image_size, image_size), jnp.float32)

    params = init_params(
        k_p,
        in_channels=3,
        patch_size=patch_size,
        hidden_dim=hidden_dim,
        mlp_dim=mlp_dim,
        num_layers=num_layers,
        num_heads=num_heads,
        seq_length=seq_length,
    )

    fwd = jax.jit(functools.partial(vit_forward, patch_size=patch_size, num_heads=num_heads))
    out = fwd(x, params)
    out = jax.block_until_ready(out)
    assert out.shape == (batch, hidden_dim), out.shape
    print("KERNEL_OK")
</pallas_src>

<mosaic_0001>
module attributes {stable_mosaic.version = 11 : i64} {
  func.func @_patch_embed_kernel(%arg0: i32, %arg1: memref<8x192xf32, #tpu.memory_space<vmem>>, %arg2: memref<192x32xbf16, #tpu.memory_space<vmem>>, %arg3: memref<1x32xf32, #tpu.memory_space<vmem>>, %arg4: memref<8x32xf32, #tpu.memory_space<vmem>>) attributes {dimension_semantics = [#tpu.dimension_semantics<parallel>], iteration_bounds = array<i64: 1>, scalar_prefetch = 0 : i64, scratch_operands = 0 : i64, tpu.core_type = #tpu.core_type<tc>, window_params = [{transform_indices = @transform_0, window_bounds = array<i64: 8, 192>}, {pipeline_mode = #tpu.pipeline_mode<synchronous>, transform_indices = @transform_1, window_bounds = array<i64: 192, 32>}, {pipeline_mode = #tpu.pipeline_mode<synchronous>, transform_indices = @transform_2, window_bounds = array<i64: 1, 32>}, {transform_indices = @transform_3, window_bounds = array<i64: 8, 32>}]} {
    %c0 = arith.constant 0 : index
    %c0_0 = arith.constant 0 : index
    %0 = vector.load %arg1[%c0, %c0_0] : memref<8x192xf32, #tpu.memory_space<vmem>>, vector<8x192xf32>
    %1 = arith.truncf %0 : vector<8x192xf32> to vector<8x192xbf16>
    %c0_1 = arith.constant 0 : index
    %c0_2 = arith.constant 0 : index
    %2 = vector.load %arg2[%c0_1, %c0_2] : memref<192x32xbf16, #tpu.memory_space<vmem>>, vector<192x32xbf16>
    %cst = arith.constant dense<0.000000e+00> : vector<8x32xf32>
    %3 = tpu.matmul %1, %2, %cst {dimension_numbers = #tpu.dot_dimension_numbers<[1], [0], [0], [1], [0, 0, 1, 1], [], []>} : vector<8x192xbf16>, vector<192x32xbf16>, vector<8x32xf32> -> vector<8x32xf32>
    %c0_3 = arith.constant 0 : index
    %c0_4 = arith.constant 0 : index
    %4 = vector.load %arg3[%c0_3, %c0_4] : memref<1x32xf32, #tpu.memory_space<vmem>>, vector<1x32xf32>
    %5 = vector.broadcast %4 : vector<1x32xf32> to vector<8x32xf32>
    %6 = arith.addf %3, %5 : vector<8x32xf32>
    %c0_5 = arith.constant 0 : index
    %c0_6 = arith.constant 0 : index
    %7 = vector.load %arg4[%c0_5, %c0_6] : memref<8x32xf32, #tpu.memory_space<vmem>>, vector<8x32xf32>
    tpu.vector_store %arg4[%c0_5, %c0_6], %6 {strides = array<i32>} : memref<8x32xf32, #tpu.memory_space<vmem>>, vector<8x32xf32>,
    return
  }
  func.func @transform_0(%arg0: i32) -> (i32, i32) {
    %c0_i32 = arith.constant 0 : i32
    %c0_i32_0 = arith.constant 0 : i32
    return %arg0, %c0_i32 : i32, i32
  }
  func.func @transform_1(%arg0: i32) -> (i32, i32) {
    %c0_i32 = arith.constant 0 : i32
    %c0_i32_0 = arith.constant 0 : i32
    %c0_i32_1 = arith.constant 0 : i32
    return %c0_i32, %c0_i32_0 : i32, i32
  }
  func.func @transform_2(%arg0: i32) -> (i32, i32) {
    %c0_i32 = arith.constant 0 : i32
    %c0_i32_0 = arith.constant 0 : i32
    %c0_i32_1 = arith.constant 0 : i32
    return %c0_i32, %c0_i32_0 : i32, i32
  }
  func.func @transform_3(%arg0: i32) -> (i32, i32) {
    %c0_i32 = arith.constant 0 : i32
    %c0_i32_0 = arith.constant 0 : i32
    return %arg0, %c0_i32 : i32, i32
  }
}

module attributes {stable_mosaic.version = 11 : i64} {
  func.func @_layernorm_kernel(%arg0: memref<2x32xf32, #tpu.memory_space<vmem>>, %arg1: memref<1x32xf32, #tpu.memory_space<vmem>>, %arg2: memref<1x32xf32, #tpu.memory_space<vmem>>, %arg3: memref<2x32xf32, #tpu.memory_space<vmem>>) attributes {dimension_semantics = [], scalar_prefetch = 0 : i64, scratch_operands = 0 : i64, tpu.core_type = #tpu.core_type<tc>} {
    %c0 = arith.constant 0 : index
    %c0_0 = arith.constant 0 : index
    %0 = vector.load %arg0[%c0, %c0_0] : memref<2x32xf32, #tpu.memory_space<vmem>>, vector<2x32xf32>
    %c0_1 = arith.constant 0 : index
    %c0_2 = arith.constant 0 : index
    %1 = vector.load %arg1[%c0_1, %c0_2] : memref<1x32xf32, #tpu.memory_space<vmem>>, vector<1x32xf32>
    %c0_3 = arith.constant 0 : index
    %c0_4 = arith.constant 0 : index
    %2 = vector.load %arg2[%c0_3, %c0_4] : memref<1x32xf32, #tpu.memory_space<vmem>>, vector<1x32xf32>
    %cst = arith.constant dense<0.000000e+00> : vector<2xf32>
    %3 = vector.multi_reduction <add>, %0, %cst [1] : vector<2x32xf32> to vector<2xf32>
    %4 = vector.shape_cast %3 : vector<2xf32> to vector<2x1xf32>
    %cst_5 = arith.constant 3.200000e+01 : f32
    %5 = vector.broadcast %cst_5 : f32 to vector<2x1xf32>
    %6 = arith.divf %4, %5 : vector<2x1xf32>
    %7 = vector.broadcast %6 : vector<2x1xf32> to vector<2x32xf32>
    %8 = arith.subf %0, %7 : vector<2x32xf32>
    %9 = arith.mulf %8, %8 : vector<2x32xf32>
    %cst_6 = arith.constant dense<0.000000e+00> : vector<2xf32>
    %10 = vector.multi_reduction <add>, %9, %cst_6 [1] : vector<2x32xf32> to vector<2xf32>
    %11 = vector.shape_cast %10 : vector<2xf32> to vector<2x1xf32>
    %cst_7 = arith.constant 3.200000e+01 : f32
    %12 = vector.broadcast %cst_7 : f32 to vector<2x1xf32>
    %13 = arith.divf %11, %12 : vector<2x1xf32>
    %14 = vector.broadcast %6 : vector<2x1xf32> to vector<2x32xf32>
    %15 = arith.subf %0, %14 : vector<2x32xf32>
    %cst_8 = arith.constant 9.99999997E-7 : f32
    %16 = vector.broadcast %cst_8 : f32 to vector<2x1xf32>
    %17 = arith.addf %13, %16 : vector<2x1xf32>
    %18 = math.rsqrt %17 : vector<2x1xf32>
    %19 = vector.broadcast %18 : vector<2x1xf32> to vector<2x32xf32>
    %20 = arith.mulf %15, %19 : vector<2x32xf32>
    %21 = vector.broadcast %1 : vector<1x32xf32> to vector<2x32xf32>
    %22 = arith.mulf %20, %21 : vector<2x32xf32>
    %23 = vector.broadcast %2 : vector<1x32xf32> to vector<2x32xf32>
    %24 = arith.addf %22, %23 : vector<2x32xf32>
    %c0_9 = arith.constant 0 : index
    %c0_10 = arith.constant 0 : index
    %25 = vector.load %arg3[%c0_9, %c0_10] : memref<2x32xf32, #tpu.memory_space<vmem>>, vector<2x32xf32>
    tpu.vector_store %arg3[%c0_9, %c0_10], %24 {strides = array<i32>} : memref<2x32xf32, #tpu.memory_space<vmem>>, vector<2x32xf32>,
    return
  }
}

module attributes {stable_mosaic.version = 11 : i64} {
  func.func @_encoder_layers_kernel(%arg0: i32, %arg1: i32, %arg2: memref<1x5x32xf32, #tpu.memory_space<vmem>>, %arg3: memref<1x1x32xf32, #tpu.memory_space<vmem>>, %arg4: memref<1x1x32xf32, #tpu.memory_space<vmem>>, %arg5: memref<1x2x32x48xbf16, #tpu.memory_space<vmem>>, %arg6: memref<1x2x1x48xf32, #tpu.memory_space<vmem>>, %arg7: memref<1x2x16x32xbf16, #tpu.memory_space<vmem>>, %arg8: memref<1x1x32xf32, #tpu.memory_space<vmem>>, %arg9: memref<1x1x32xf32, #tpu.memory_space<vmem>>, %arg10: memref<1x1x32xf32, #tpu.memory_space<vmem>>, %arg11: memref<1x32x64xbf16, #tpu.memory_space<vmem>>, %arg12: memref<1x1x64xf32, #tpu.memory_space<vmem>>, %arg13: memref<1x64x32xbf16, #tpu.memory_space<vmem>>, %arg14: memref<1x1x32xf32, #tpu.memory_space<vmem>>, %arg15: memref<1x5x32xf32, #tpu.memory_space<vmem>>, %arg16: memref<5x32xf32, #tpu.memory_space<vmem>>) attributes {dimension_semantics = [#tpu.dimension_semantics<parallel>, #tpu.dimension_semantics<arbitrary>], iteration_bounds = array<i64: 2, 2>, scalar_prefetch = 0 : i64, scratch_operands = 1 : i64, tpu.core_type = #tpu.core_type<tc>, window_params = [{transform_indices = @transform_0, window_bounds = array<i64: 1, 5, 32>}, {transform_indices = @transform_1, window_bounds = array<i64: 1, 1, 32>}, {transform_indices = @transform_2, window_bounds = array<i64: 1, 1, 32>}, {transform_indices = @transform_3, window_bounds = array<i64: 1, 2, 32, 48>}, {transform_indices = @transform_4, window_bounds = array<i64: 1, 2, 1, 48>}, {transform_indices = @transform_5, window_bounds = array<i64: 1, 2, 16, 32>}, {transform_indices = @transform_6, window_bounds = array<i64: 1, 1, 32>}, {transform_indices = @transform_7, window_bounds = array<i64: 1, 1, 32>}, {transform_indices = @transform_8, window_bounds = array<i64: 1, 1, 32>}, {transform_indices = @transform_9, window_bounds = array<i64: 1, 32, 64>}, {transform_indices = @transform_10, window_bounds = array<i64: 1, 1, 64>}, {transform_indices = @transform_11, window_bounds = array<i64: 1, 64, 32>}, {transform_indices = @transform_12, window_bounds = array<i64: 1, 1, 32>}, {transform_indices = @transform_13, window_bounds = array<i64: 1, 5, 32>}]} {
    %c0_i32 = arith.constant 0 : i32
    %0 = arith.cmpi eq, %arg1, %c0_i32 : i32
    %1 = arith.extui %0 : i1 to i32
    %c0_i32_0 = arith.constant 0 : i32
    %2 = arith.cmpi ne, %1, %c0_i32_0 : i32
    scf.if %2 {
      %c0_67 = arith.constant 0 : index
      %c0_68 = arith.constant 0 : index
      %c0_69 = arith.constant 0 : index
      %132 = vector.load %arg2[%c0_67, %c0_68, %c0_69] : memref<1x5x32xf32, #tpu.memory_space<vmem>>, vector<1x5x32xf32>
      %133 = vector.shape_cast %132 : vector<1x5x32xf32> to vector<5x32xf32>
      %c0_70 = arith.constant 0 : index
      %c0_71 = arith.constant 0 : index
      %134 = vector.load %arg16[%c0_70, %c0_71] : memref<5x32xf32, #tpu.memory_space<vmem>>, vector<5x32xf32>
      tpu.vector_store %arg16[%c0_70, %c0_71], %133 {strides = array<i32>} : memref<5x32xf32, #tpu.memory_space<vmem>>, vector<5x32xf32>,
    } else {
    }
    %c0 = arith.constant 0 : index
    %c0_1 = arith.constant 0 : index
    %3 = vector.load %arg16[%c0, %c0_1] : memref<5x32xf32, #tpu.memory_space<vmem>>, vector<5x32xf32>
    %c0_2 = arith.constant 0 : index
    %c0_3 = arith.constant 0 : index
    %c0_4 = arith.constant 0 : index
    %4 = vector.load %arg3[%c0_2, %c0_3, %c0_4] : memref<1x1x32xf32, #tpu.memory_space<vmem>>, vector<1x1x32xf32>
    %5 = vector.shape_cast %4 : vector<1x1x32xf32> to vector<1x32xf32>
    %c0_5 = arith.constant 0 : index
    %c0_6 = arith.constant 0 : index
    %c0_7 = arith.constant 0 : index
    %6 = vector.load %arg4[%c0_5, %c0_6, %c0_7] : memref<1x1x32xf32, #tpu.memory_space<vmem>>, vector<1x1x32xf32>
    %7 = vector.shape_cast %6 : vector<1x1x32xf32> to vector<1x32xf32>
    %cst = arith.constant dense<0.000000e+00> : vector<5xf32>
    %8 = vector.multi_reduction <add>, %3, %cst [1] : vector<5x32xf32> to vector<5xf32>
    %9 = vector.shape_cast %8 : vector<5xf32> to vector<5x1xf32>
    %cst_8 = arith.constant 3.200000e+01 : f32
    %10 = vector.broadcast %cst_8 : f32 to vector<5x1xf32>
    %11 = arith.divf %9, %10 : vector<5x1xf32>
    %12 = vector.broadcast %11 : vector<5x1xf32> to vector<5x32xf32>
    %13 = arith.subf %3, %12 : vector<5x32xf32>
    %14 = arith.mulf %13, %13 : vector<5x32xf32>
    %cst_9 = arith.constant dense<0.000000e+00> : vector<5xf32>
    %15 = vector.multi_reduction <add>, %14, %cst_9 [1] : vector<5x32xf32> to vector<5xf32>
    %16 = vector.shape_cast %15 : vector<5xf32> to vector<5x1xf32>
    %cst_10 = arith.constant 3.200000e+01 : f32
    %17 = vector.broadcast %cst_10 : f32 to vector<5x1xf32>
    %18 = arith.divf %16, %17 : vector<5x1xf32>
    %19 = vector.broadcast %11 : vector<5x1xf32> to vector<5x32xf32>
    %20 = arith.subf %3, %19 : vector<5x32xf32>
    %cst_11 = arith.constant 9.99999997E-7 : f32
    %21 = vector.broadcast %cst_11 : f32 to vector<5x1xf32>
    %22 = arith.addf %18, %21 : vector<5x1xf32>
    %23 = math.rsqrt %22 : vector<5x1xf32>
    %24 = vector.broadcast %23 : vector<5x1xf32> to vector<5x32xf32>
    %25 = arith.mulf %20, %24 : vector<5x32xf32>
    %26 = vector.broadcast %5 : vector<1x32xf32> to vector<5x32xf32>
    %27 = arith.mulf %25, %26 : vector<5x32xf32>
    %28 = vector.broadcast %7 : vector<1x32xf32> to vector<5x32xf32>
    %29 = arith.addf %27, %28 : vector<5x32xf32>
    %30 = arith.truncf %29 : vector<5x32xf32> to vector<5x32xbf16>
    %31 = vector.shape_cast %30 : vector<5x32xbf16> to vector<1x5x32xbf16>
    %32 = vector.shape_cast %31 : vector<1x5x32xbf16> to vector<1x5x32xbf16>
    %33 = vector.broadcast %32 : vector<1x5x32xbf16> to vector<2x5x32xbf16>
    %c0_12 = arith.constant 0 : index
    %c0_13 = arith.constant 0 : index
    %c0_14 = arith.constant 0 : index
    %c0_15 = arith.constant 0 : index
    %34 = vector.load %arg5[%c0_12, %c0_13, %c0_14, %c0_15] : memref<1x2x32x48xbf16, #tpu.memory_space<vmem>>, vector<1x2x32x48xbf16>
    %35 = vector.shape_cast %34 : vector<1x2x32x48xbf16> to vector<2x32x48xbf16>
    "tpu.trace_start"() <{level = 10 : i32, message = "hsd,hdf->hsf"}> : () -> ()
    %cst_16 = arith.constant dense<0.000000e+00> : vector<2x5x48xf32>
    %36 = tpu.matmul %33, %35, %cst_16 {dimension_numbers = #tpu.dot_dimension_numbers<[2], [1], [1], [2], [0, 0, 0, 1, 1, 2], [0], [0]>} : vector<2x5x32xbf16>, vector<2x32x48xbf16>, vector<2x5x48xf32> -> vector<2x5x48xf32>
    "tpu.trace_stop"() : () -> ()
    %c0_17 = arith.constant 0 : index
    %c0_18 = arith.constant 0 : index
    %c0_19 = arith.constant 0 : index
    %c0_20 = arith.constant 0 : index
    %37 = vector.load %arg6[%c0_17, %c0_18, %c0_19, %c0_20] : memref<1x2x1x48xf32, #tpu.memory_space<vmem>>, vector<1x2x1x48xf32>
    %38 = vector.shape_cast %37 : vector<1x2x1x48xf32> to vector<2x1x48xf32>
    %39 = vector.broadcast %38 : vector<2x1x48xf32> to vector<2x5x48xf32>
    %40 = arith.addf %36, %39 : vector<2x5x48xf32>
    %41 = vector.extract_strided_slice %40 {offsets = [0, 0, 0], sizes = [2, 5, 16], strides = [1, 1, 1]} : vector<2x5x48xf32> to vector<2x5x16xf32>
    %42 = vector.extract_strided_slice %40 {offsets = [0, 0, 16], sizes = [2, 5, 16], strides = [1, 1, 1]} : vector<2x5x48xf32> to vector<2x5x16xf32>
    %43 = vector.extract_strided_slice %40 {offsets = [0, 0, 32], sizes = [2, 5, 16], strides = [1, 1, 1]} : vector<2x5x48xf32> to vector<2x5x16xf32>
    %44 = arith.truncf %41 : vector<2x5x16xf32> to vector<2x5x16xbf16>
    %45 = arith.truncf %42 : vector<2x5x16xf32> to vector<2x5x16xbf16>
    "tpu.trace_start"() <{level = 10 : i32, message = "hqd,hkd->hqk"}> : () -> ()
    %cst_21 = arith.constant dense<0.000000e+00> : vector<2x5x5xf32>
    %46 = tpu.matmul %44, %45, %cst_21 {dimension_numbers = #tpu.dot_dimension_numbers<[2], [2], [1], [1], [0, 0, 0, 1, 1, 1], [0], [0]>} : vector<2x5x16xbf16>, vector<2x5x16xbf16>, vector<2x5x5xf32> -> vector<2x5x5xf32>
    "tpu.trace_stop"() : () -> ()
    %cst_22 = arith.constant 2.500000e-01 : f32
    %47 = vector.broadcast %cst_22 : f32 to vector<2x5x5xf32>
    %48 = arith.mulf %46, %47 : vector<2x5x5xf32>
    %cst_23 = arith.constant dense<0xFF800000> : vector<2x5xf32>
    %49 = vector.multi_reduction <maximumf>, %48, %cst_23 [2] : vector<2x5x5xf32> to vector<2x5xf32>
    %50 = vector.shape_cast %49 : vector<2x5xf32> to vector<2x5x1xf32>
    %51 = vector.broadcast %50 : vector<2x5x1xf32> to vector<2x5x5xf32>
    %52 = arith.subf %48, %51 : vector<2x5x5xf32>
    %53 = math.exp %52 : vector<2x5x5xf32>
    %cst_24 = arith.constant dense<0.000000e+00> : vector<2x5xf32>
    %54 = vector.multi_reduction <add>, %53, %cst_24 [2] : vector<2x5x5xf32> to vector<2x5xf32>
    %55 = vector.shape_cast %54 : vector<2x5xf32> to vector<2x5x1xf32>
    %56 = tpu.reciprocal %55 {approx = true} : vector<2x5x1xf32> -> vector<2x5x1xf32>
    %57 = vector.broadcast %56 : vector<2x5x1xf32> to vector<2x5x5xf32>
    %58 = arith.mulf %53, %57 : vector<2x5x5xf32>
    %59 = arith.truncf %58 : vector<2x5x5xf32> to vector<2x5x5xbf16>
    %60 = arith.truncf %43 : vector<2x5x16xf32> to vector<2x5x16xbf16>
    "tpu.trace_start"() <{level = 10 : i32, message = "hqk,hkd->hqd"}> : () -> ()
    %cst_25 = arith.constant dense<0.000000e+00> : vector<2x5x16xf32>
    %61 = tpu.matmul %59, %60, %cst_25 {dimension_numbers = #tpu.dot_dimension_numbers<[2], [1], [1], [2], [0, 0, 0, 1, 1, 2], [0], [0]>} : vector<2x5x5xbf16>, vector<2x5x16xbf16>, vector<2x5x16xf32> -> vector<2x5x16xf32>
    "tpu.trace_stop"() : () -> ()
    %62 = arith.truncf %61 : vector<2x5x16xf32> to vector<2x5x16xbf16>
    %c0_26 = arith.constant 0 : index
    %c0_27 = arith.constant 0 : index
    %c0_28 = arith.constant 0 : index
    %c0_29 = arith.constant 0 : index
    %63 = vector.load %arg7[%c0_26, %c0_27, %c0_28, %c0_29] : memref<1x2x16x32xbf16, #tpu.memory_space<vmem>>, vector<1x2x16x32xbf16>
    %64 = vector.shape_cast %63 : vector<1x2x16x32xbf16> to vector<2x16x32xbf16>
    "tpu.trace_start"() <{level = 10 : i32, message = "hsd,hdf->hsf"}> : () -> ()
    %cst_30 = arith.constant dense<0.000000e+00> : vector<2x5x32xf32>
    %65 = tpu.matmul %62, %64, %cst_30 {dimension_numbers = #tpu.dot_dimension_numbers<[2], [1], [1], [2], [0, 0, 0, 1, 1, 2], [0], [0]>} : vector<2x5x16xbf16>, vector<2x16x32xbf16>, vector<2x5x32xf32> -> vector<2x5x32xf32>
    "tpu.trace_stop"() : () -> ()
    %cst_31 = arith.constant dense<0.000000e+00> : vector<5x32xf32>
    %66 = vector.multi_reduction <add>, %65, %cst_31 [0] : vector<2x5x32xf32> to vector<5x32xf32>
    %c0_32 = arith.constant 0 : index
    %c0_33 = arith.constant 0 : index
    %c0_34 = arith.constant 0 : index
    %67 = vector.load %arg8[%c0_32, %c0_33, %c0_34] : memref<1x1x32xf32, #tpu.memory_space<vmem>>, vector<1x1x32xf32>
    %68 = vector.shape_cast %67 : vector<1x1x32xf32> to vector<1x32xf32>
    %69 = vector.broadcast %68 : vector<1x32xf32> to vector<5x32xf32>
    %70 = arith.addf %66, %69 : vector<5x32xf32>
    %71 = arith.addf %3, %70 : vector<5x32xf32>
    %c0_35 = arith.constant 0 : index
    %c0_36 = arith.constant 0 : index
    %c0_37 = arith.constant 0 : index
    %72 = vector.load %arg9[%c0_35, %c0_36, %c0_37] : memref<1x1x32xf32, #tpu.memory_space<vmem>>, vector<1x1x32xf32>
    %73 = vector.shape_cast %72 : vector<1x1x32xf32> to vector<1x32xf32>
    %c0_38 = arith.constant 0 : index
    %c0_39 = arith.constant 0 : index
    %c0_40 = arith.constant 0 : index
    %74 = vector.load %arg10[%c0_38, %c0_39, %c0_40] : memref<1x1x32xf32, #tpu.memory_space<vmem>>, vector<1x1x32xf32>
    %75 = vector.shape_cast %74 : vector<1x1x32xf32> to vector<1x32xf32>
    %cst_41 = arith.constant dense<0.000000e+00> : vector<5xf32>
    %76 = vector.multi_reduction <add>, %71, %cst_41 [1] : vector<5x32xf32> to vector<5xf32>
    %77 = vector.shape_cast %76 : vector<5xf32> to vector<5x1xf32>
    %cst_42 = arith.constant 3.200000e+01 : f32
    %78 = vector.broadcast %cst_42 : f32 to vector<5x1xf32>
    %79 = arith.divf %77, %78 : vector<5x1xf32>
    %80 = vector.broadcast %79 : vector<5x1xf32> to vector<5x32xf32>
    %81 = arith.subf %71, %80 : vector<5x32xf32>
    %82 = arith.mulf %81, %81 : vector<5x32xf32>
    %cst_43 = arith.constant dense<0.000000e+00> : vector<5xf32>
    %83 = vector.multi_reduction <add>, %82, %cst_43 [1] : vector<5x32xf32> to vector<5xf32>
    %84 = vector.shape_cast %83 : vector<5xf32> to vector<5x1xf32>
    %cst_44 = arith.constant 3.200000e+01 : f32
    %85 = vector.broadcast %cst_44 : f32 to vector<5x1xf32>
    %86 = arith.divf %84, %85 : vector<5x1xf32>
    %87 = vector.broadcast %79 : vector<5x1xf32> to vector<5x32xf32>
    %88 = arith.subf %71, %87 : vector<5x32xf32>
    %cst_45 = arith.constant 9.99999997E-7 : f32
    %89 = vector.broadcast %cst_45 : f32 to vector<5x1xf32>
    %90 = arith.addf %86, %89 : vector<5x1xf32>
    %91 = math.rsqrt %90 : vector<5x1xf32>
    %92 = vector.broadcast %91 : vector<5x1xf32> to vector<5x32xf32>
    %93 = arith.mulf %88, %92 : vector<5x32xf32>
    %94 = vector.broadcast %73 : vector<1x32xf32> to vector<5x32xf32>
    %95 = arith.mulf %93, %94 : vector<5x32xf32>
    %96 = vector.broadcast %75 : vector<1x32xf32> to vector<5x32xf32>
    %97 = arith.addf %95, %96 : vector<5x32xf32>
    %98 = arith.truncf %97 : vector<5x32xf32> to vector<5x32xbf16>
    %c0_46 = arith.constant 0 : index
    %c0_47 = arith.constant 0 : index
    %c0_48 = arith.constant 0 : index
    %99 = vector.load %arg11[%c0_46, %c0_47, %c0_48] : memref<1x32x64xbf16, #tpu.memory_space<vmem>>, vector<1x32x64xbf16>
    %100 = vector.shape_cast %99 : vector<1x32x64xbf16> to vector<32x64xbf16>
    %cst_49 = arith.constant dense<0.000000e+00> : vector<5x64xf32>
    %101 = tpu.matmul %98, %100, %cst_49 {dimension_numbers = #tpu.dot_dimension_numbers<[1], [0], [0], [1], [0, 0, 1, 1], [], []>} : vector<5x32xbf16>, vector<32x64xbf16>, vector<5x64xf32> -> vector<5x64xf32>
    %c0_50 = arith.constant 0 : index
    %c0_51 = arith.constant 0 : index
    %c0_52 = arith.constant 0 : index
    %102 = vector.load %arg12[%c0_50, %c0_51, %c0_52] : memref<1x1x64xf32, #tpu.memory_space<vmem>>, vector<1x1x64xf32>
    %103 = vector.shape_cast %102 : vector<1x1x64xf32> to vector<1x64xf32>
    %104 = vector.broadcast %103 : vector<1x64xf32> to vector<5x64xf32>
    %105 = arith.addf %101, %104 : vector<5x64xf32>
    %cst_53 = arith.constant 5.000000e-01 : f32
    %106 = vector.broadcast %cst_53 : f32 to vector<5x64xf32>
    %107 = arith.mulf %106, %105 : vector<5x64xf32>
    %cst_54 = arith.constant 4.471500e-02 : f32
    %108 = vector.broadcast %cst_54 : f32 to vector<5x64xf32>
    %109 = arith.mulf %108, %105 : vector<5x64xf32>
    %110 = arith.mulf %109, %105 : vector<5x64xf32>
    %111 = arith.mulf %110, %105 : vector<5x64xf32>
    %112 = arith.addf %105, %111 : vector<5x64xf32>
    %cst_55 = arith.constant 0.797884583 : f32
    %113 = vector.broadcast %cst_55 : f32 to vector<5x64xf32>
    %114 = arith.mulf %113, %112 : vector<5x64xf32>
    %115 = math.tanh %114 : vector<5x64xf32>
    %cst_56 = arith.constant 1.000000e+00 : f32
    %116 = vector.broadcast %cst_56 : f32 to vector<5x64xf32>
    %117 = arith.addf %116, %115 : vector<5x64xf32>
    %118 = arith.mulf %107, %117 : vector<5x64xf32>
    %119 = arith.truncf %118 : vector<5x64xf32> to vector<5x64xbf16>
    %c0_57 = arith.constant 0 : index
    %c0_58 = arith.constant 0 : index
    %c0_59 = arith.constant 0 : index
    %120 = vector.load %arg13[%c0_57, %c0_58, %c0_59] : memref<1x64x32xbf16, #tpu.memory_space<vmem>>, vector<1x64x32xbf16>
    %121 = vector.shape_cast %120 : vector<1x64x32xbf16> to vector<64x32xbf16>
    %cst_60 = arith.constant dense<0.000000e+00> : vector<5x32xf32>
    %122 = tpu.matmul %119, %121, %cst_60 {dimension_numbers = #tpu.dot_dimension_numbers<[1], [0], [0], [1], [0, 0, 1, 1], [], []>} : vector<5x64xbf16>, vector<64x32xbf16>, vector<5x32xf32> -> vector<5x32xf32>
    %c0_61 = arith.constant 0 : index
    %c0_62 = arith.constant 0 : index
    %c0_63 = arith.constant 0 : index
    %123 = vector.load %arg14[%c0_61, %c0_62, %c0_63] : memref<1x1x32xf32, #tpu.memory_space<vmem>>, vector<1x1x32xf32>
    %124 = vector.shape_cast %123 : vector<1x1x32xf32> to vector<1x32xf32>
    %125 = vector.broadcast %124 : vector<1x32xf32> to vector<5x32xf32>
    %126 = arith.addf %122, %125 : vector<5x32xf32>
    %127 = arith.addf %71, %126 : vector<5x32xf32>
    %c0_64 = arith.constant 0 : index
    %c0_65 = arith.constant 0 : index
    %128 = vector.load %arg16[%c0_64, %c0_65] : memref<5x32xf32, #tpu.memory_space<vmem>>, vector<5x32xf32>
    tpu.vector_store %arg16[%c0_64, %c0_65], %127 {strides = array<i32>} : memref<5x32xf32, #tpu.memory_space<vmem>>, vector<5x32xf32>,
    %c1_i32 = arith.constant 1 : i32
    %129 = arith.cmpi eq, %arg1, %c1_i32 : i32
    %130 = arith.extui %129 : i1 to i32
    %c0_i32_66 = arith.constant 0 : i32
    %131 = arith.cmpi ne, %130, %c0_i32_66 : i32
    scf.if %131 {
      %c0_67 = arith.constant 0 : index
      %c0_68 = arith.constant 0 : index
      %c0_69 = arith.constant 0 : index
      %132 = vector.load %arg15[%c0_67, %c0_68, %c0_69] : memref<1x5x32xf32, #tpu.memory_space<vmem>>, vector<1x5x32xf32>
      %133 = vector.shape_cast %132 : vector<1x5x32xf32> to vector<5x32xf32>
      %134 = vector.shape_cast %127 : vector<5x32xf32> to vector<1x5x32xf32>
      tpu.vector_store %arg15[%c0_67, %c0_68, %c0_69], %134 {strides = array<i32>} : memref<1x5x32xf32, #tpu.memory_space<vmem>>, vector<1x5x32xf32>,
    } else {
    }
    return
  }
  func.func @transform_0(%arg0: i32, %arg1: i32) -> (i32, i32, i32) {
    %c0_i32 = arith.constant 0 : i32
    %c0_i32_0 = arith.constant 0 : i32
    %c0_i32_1 = arith.constant 0 : i32
    return %arg0, %c0_i32, %c0_i32_0 : i32, i32, i32
  }
  func.func @transform_1(%arg0: i32, %arg1: i32) -> (i32, i32, i32) {
    %c0_i32 = arith.constant 0 : i32
    %c0_i32_0 = arith.constant 0 : i32
    %c0_i32_1 = arith.constant 0 : i32
    return %arg1, %c0_i32, %c0_i32_0 : i32, i32, i32
  }
  func.func @transform_2(%arg0: i32, %arg1: i32) -> (i32, i32, i32) {
    %c0_i32 = arith.constant 0 : i32
    %c0_i32_0 = arith.constant 0 : i32
    %c0_i32_1 = arith.constant 0 : i32
    return %arg1, %c0_i32, %c0_i32_0 : i32, i32, i32
  }
  func.func @transform_3(%arg0: i32, %arg1: i32) -> (i32, i32, i32, i32) {
    %c0_i32 = arith.constant 0 : i32
    %c0_i32_0 = arith.constant 0 : i32
    %c0_i32_1 = arith.constant 0 : i32
    %c0_i32_2 = arith.constant 0 : i32
    return %arg1, %c0_i32, %c0_i32_0, %c0_i32_1 : i32, i32, i32, i32
  }
  func.func @transform_4(%arg0: i32, %arg1: i32) -> (i32, i32, i32, i32) {
    %c0_i32 = arith.constant 0 : i32
    %c0_i32_0 = arith.constant 0 : i32
    %c0_i32_1 = arith.constant 0 : i32
    %c0_i32_2 = arith.constant 0 : i32
    return %arg1, %c0_i32, %c0_i32_0, %c0_i32_1 : i32, i32, i32, i32
  }
  func.func @transform_5(%arg0: i32, %arg1: i32) -> (i32, i32, i32, i32) {
    %c0_i32 = arith.constant 0 : i32
    %c0_i32_0 = arith.constant 0 : i32
    %c0_i32_1 = arith.constant 0 : i32
    %c0_i32_2 = arith.constant 0 : i32
    return %arg1, %c0_i32, %c0_i32_0, %c0_i32_1 : i32, i32, i32, i32
  }
  func.func @transform_6(%arg0: i32, %arg1: i32) -> (i32, i32, i32) {
    %c0_i32 = arith.constant 0 : i32
    %c0_i32_0 = arith.constant 0 : i32
    %c0_i32_1 = arith.constant 0 : i32
    return %arg1, %c0_i32, %c0_i32_0 : i32, i32, i32
  }
  func.func @transform_7(%arg0: i32, %arg1: i32) -> (i32, i32, i32) {
    %c0_i32 = arith.constant 0 : i32
    %c0_i32_0 = arith.constant 0 : i32
    %c0_i32_1 = arith.constant 0 : i32
    return %arg1, %c0_i32, %c0_i32_0 : i32, i32, i32
  }
  func.func @transform_8(%arg0: i32, %arg1: i32) -> (i32, i32, i32) {
    %c0_i32 = arith.constant 0 : i32
    %c0_i32_0 = arith.constant 0 : i32
    %c0_i32_1 = arith.constant 0 : i32
    return %arg1, %c0_i32, %c0_i32_0 : i32, i32, i32
  }
  func.func @transform_9(%arg0: i32, %arg1: i32) -> (i32, i32, i32) {
    %c0_i32 = arith.constant 0 : i32
    %c0_i32_0 = arith.constant 0 : i32
    %c0_i32_1 = arith.constant 0 : i32
    return %arg1, %c0_i32, %c0_i32_0 : i32, i32, i32
  }
  func.func @transform_10(%arg0: i32, %arg1: i32) -> (i32, i32, i32) {
    %c0_i32 = arith.constant 0 : i32
    %c0_i32_0 = arith.constant 0 : i32
    %c0_i32_1 = arith.constant 0 : i32
    return %arg1, %c0_i32, %c0_i32_0 : i32, i32, i32
  }
  func.func @transform_11(%arg0: i32, %arg1: i32) -> (i32, i32, i32) {
    %c0_i32 = arith.constant 0 : i32
    %c0_i32_0 = arith.constant 0 : i32
    %c0_i32_1 = arith.constant 0 : i32
    return %arg1, %c0_i32, %c0_i32_0 : i32, i32, i32
  }
  func.func @transform_12(%arg0: i32, %arg1: i32) -> (i32, i32, i32) {
    %c0_i32 = arith.constant 0 : i32
    %c0_i32_0 = arith.constant 0 : i32
    %c0_i32_1 = arith.constant 0 : i32
    return %arg1, %c0_i32, %c0_i32_0 : i32, i32, i32
  }
  func.func @transform_13(%arg0: i32, %arg1: i32) -> (i32, i32, i32) {
    %c0_i32 = arith.constant 0 : i32
    %c0_i32_0 = arith.constant 0 : i32
    %c0_i32_1 = arith.constant 0 : i32
    return %arg0, %c0_i32, %c0_i32_0 : i32, i32, i32
  }
}

</mosaic_0001>

<llo_original>
// kernel: vit_forward.5
$region0: #{vit_forward.5}
  #allocation0 [shape = 'u32[]', space=smem, size = 0x4, offset = 0x4, fixed_abs, tag = 'smem constant byte address 0x4 - core index']
  #allocation1 [shape = 'u32[144,128]{1,0:T(1,128)}', space=vmem, size = 0x12000, scoped, tag = 'internal scratch']
  %s0 = inlined_call_operand.vmem [shape: f32[2,32], index: 0, kind: input, shape index: {}]
  %s1 = inlined_call_operand.vmem [shape: f32[1,32], index: 1, kind: input, shape index: {}]
  %s2 = inlined_call_operand.vmem [shape: f32[1,32], index: 2, kind: input, shape index: {}]
  %s3 = inlined_call_operand.hbm [shape: f32[2,32], index: 3, kind: output, shape index: {}]
  %s4 = sld [smem:[#allocation0]]
  $region22: #{vit_forward.5} parent=0
    _
  %s6 = ssub.s32 1, %s4
  %s7 = scalar_select 0, %s6, %s4
  $region1: #{vit_forward.5} parent=0
    #allocation2 [shape = 'u8[1024]{0}', space=vmem, size = 0x400, scoped, tag = 'output window, operand 0, single buffered']
    #allocation3 [shape = 's32[1]{0}', space=sflag, size = 0x4, scoped, tag = 'scoped memory for vit_forward.5']
    %8 = vsyncpa [#allocation3], 0
    // Predicated region
    $region2: #{vit_forward.5} parent=1 // pred_check
      _
    $region3: #{vit_forward.5} parent=1 // pred_check_branch
      %10 = sbr.rel (0) target = $region5
    $region4: #{vit_forward.5} parent=1 // pred_region
      _
    $region5: #{vit_forward.5} parent=1 // pred_fallthru
      _
    // Predicated region
    $region6: #{vit_forward.5} parent=1 // pred_check
      _
    $region7: #{vit_forward.5} parent=1 // pred_check_branch
      %12 = sbr.rel (0) target = $region9
    $region8: #{vit_forward.5} parent=1 // pred_region
      _
    $region9: #{vit_forward.5} parent=1 // pred_fallthru
      _
    // Predicated region
    $region10: #{vit_forward.5} parent=1 // pred_check
      _
    $region11: #{vit_forward.5} parent=1 // pred_check_branch
      %14 = sbr.rel (0) target = $region13
    $region12: #{vit_forward.5} parent=1 // pred_region
      _
    $region13: #{vit_forward.5} parent=1 // pred_fallthru
      _
    %v15 = vld [vmem:[%s0] sm:$0x3]
    %v16 = vld [vmem:[%s1] sm:$0x1]
    %v17 = vld [vmem:[%s2] sm:$0x1]
    %vm18 = vcmask 254976
    %v19 = vsel %vm18, %v15, 0.0
    %20 = vadd.xlane.f32.xlu0 %v19
    %v21 = vpop.xlane.xlu0 %20
    %v22 = vrcp.pop 32.0
    %v23 = vmul.f32 %v21, %v22
    %v24 = vsub.f32 %v15, %v23
    %v25 = vmul.f32 %v24, %v24
    %v26 = vsel %vm18, %v25, 0.0
    %27 = vadd.xlane.f32.xlu0 %v26
    %v28 = vpop.xlane.xlu0 %27
    %v29 = vmul.f32 %v28, %v22
    %v30 = vadd.f32 %v29, 1e-06
    %v31 = vrsqrt.pop %v30
    %v32 = vmul.f32 %v24, %v31
    %v34 = vlaneseq
    %v35 = vshrl.u32 %v34, 7
    %v36 = vsub.s32 0, %v35
    %v37 = vrot.slane %v16, %v36
    %v39 = vmul.f32 %v32, %v37
    %v41 = vlaneseq
    %v42 = vshrl.u32 %v41, 7
    %v43 = vsub.s32 0, %v42
    %v44 = vrot.slane %v17, %v43
    %v46 = vadd.f32 %v39, %v44
    %47 = vst.msk [vmem:[#allocation2] sm:$0x3] %vm18, %v46
    // Predicated region
    $region14: #{vit_forward.5} parent=1 // pred_check
      _
    $region15: #{vit_forward.5} parent=1 // pred_check_branch
      %49 = sbr.rel (0) target = $region17
    $region16: #{vit_forward.5} parent=1 // pred_region
      %s51 = ssub.s32 32, 32
      %52 = vsyncadd [#allocation3], %s51
      %s54 = sshll.u32 [#allocation2], 4
      %s55 = int_to_ptr.vmem [resolvable:$true] %s54
      %57 = dma.vmem_to_hbm [thread:$0]  %s55, 32, %s3, [#allocation3]
    $region17: #{vit_forward.5} parent=1 // pred_fallthru
      _
    // Predicated region
    $region18: #{vit_forward.5} parent=1 // pred_check
      _
    $region19: #{vit_forward.5} parent=1 // pred_check_branch
      %59 = sbr.rel (0) target = $region21
    $region20: #{vit_forward.5} parent=1 // pred_region
      %60 = dma.done [#allocation3], 32
    $region21: #{vit_forward.5} parent=1 // pred_fallthru
      _
    %61 = vsyncpa [#allocation3], 1

// kernel: vit_forward.3
$region0: #{vit_forward.3}
  #allocation0 [shape = 'u32[]', space=smem, size = 0x4, offset = 0x4, fixed_abs, tag = 'smem constant byte address 0x4 - core index']
  #allocation1 [shape = 'u32[144,128]{1,0:T(1,128)}', space=vmem, size = 0x12000, scoped, tag = 'internal scratch']
  %s0 = inlined_call_operand.vmem [shape: f32[8,192], index: 0, kind: input, shape index: {}]
  %s1 = inlined_call_operand.vmem [shape: bf16[192,32], index: 1, kind: input, shape index: {}]
  %s2 = inlined_call_operand.vmem [shape: f32[1,32], index: 2, kind: input, shape index: {}]
  %s3 = inlined_call_operand.vmem [shape: f32[8,32], index: 3, kind: output, shape index: {}]
  %s4 = sld [smem:[#allocation0]]
  $region22: #{vit_forward.3} parent=0
    _
  %s6 = ssub.s32 1, %s4
  %s7 = scalar_select 0, %s6, %s4
  // Predicated region
  $region2: #{vit_forward.3} parent=0 // pred_check
    _
  $region3: #{vit_forward.3} parent=0 // pred_check_branch
    %9 = sbr.rel (0) target = $region5
  $region4: #{vit_forward.3} parent=0 // pred_region
    _
  $region5: #{vit_forward.3} parent=0 // pred_fallthru
    _
  // Predicated region
  $region6: #{vit_forward.3} parent=0 // pred_check
    _
  $region7: #{vit_forward.3} parent=0 // pred_check_branch
    %11 = sbr.rel (0) target = $region9
  $region8: #{vit_forward.3} parent=0 // pred_region
    _
  $region9: #{vit_forward.3} parent=0 // pred_fallthru
    _
  // Predicated region
  $region10: #{vit_forward.3} parent=0 // pred_check
    _
  $region11: #{vit_forward.3} parent=0 // pred_check_branch
    %13 = sbr.rel (0) target = $region13
  $region12: #{vit_forward.3} parent=0 // pred_region
    _
  $region13: #{vit_forward.3} parent=0 // pred_fallthru
    _
  %v15 = vld [vmem:[%s0] sm:$0xff]
  %v16 = vld [vmem:[%s0 + $0x8] sm:$0xff]
  %v17 = vpack.c.bf16 %v15, %v15
  %v18 = vpack.c.bf16 %v16, %v16
  %v19 = vld [vmem:[%s1] sm:$0xf]
  %v20 = vld [vmem:[%s1 + $0x4] sm:$0xf]
  %v21 = vld [vmem:[%s1 + $0x8] sm:$0xf]
  %v22 = vld [vmem:[%s1 + $0xc] sm:$0xf]
  %v23 = vld [vmem:[%s1 + $0x10] sm:$0xf]
  %v24 = vld [vmem:[%s1 + $0x14] sm:$0xf]
  %v25 = vld [vmem:[%s1 + $0x18] sm:$0xf]
  %v26 = vld [vmem:[%s1 + $0x1c] sm:$0xf]
  %v27 = vld [vmem:[%s1 + $0x20] sm:$0xf]
  %v28 = vld [vmem:[%s1 + $0x24] sm:$0xf]
  %v29 = vld [vmem:[%s1 + $0x28] sm:$0xf]
  %v30 = vld [vmem:[%s1 + $0x2c] sm:$0xf]
  %v31 = vld [vmem:[%s1 + $0x30] sm:$0xf]
  %v32 = vld [vmem:[%s1 + $0x34] sm:$0xf]
  %v33 = vld [vmem:[%s1 + $0x38] sm:$0xf]
  %v34 = vld [vmem:[%s1 + $0x3c] sm:$0xf]
  %v35 = vld [vmem:[%s1 + $0x40] sm:$0xf]
  %v36 = vld [vmem:[%s1 + $0x44] sm:$0xf]
  %v37 = vld [vmem:[%s1 + $0x48] sm:$0xf]
  %v38 = vld [vmem:[%s1 + $0x4c] sm:$0xf]
  %v39 = vld [vmem:[%s1 + $0x50] sm:$0xf]
  %v40 = vld [vmem:[%s1 + $0x54] sm:$0xf]
  %v41 = vld [vmem:[%s1 + $0x58] sm:$0xf]
  %v42 = vld [vmem:[%s1 + $0x5c] sm:$0xf]
  %v43 = vld [vmem:[%s2] sm:$0x1]
  %v45 = vlaneseq
  %v46 = vshrl.u32 %v45, 7
  %v47 = vsub.s32 0, %v46
  %v48 = vrot.slane %v43, %v47
  %v74 = vunpack.c.l.b16 %v19
  %v75 = vunpack.c.l.b16 %v20
  %v76 = vunpack.c.l.b16 %v21
  %v77 = vunpack.c.l.b16 %v22
  %v78 = vunpack.c.l.b16 %v23
  %v79 = vunpack.c.l.b16 %v24
  %v80 = vunpack.c.l.b16 %v25
  %v81 = vunpack.c.l.b16 %v26
  %v82 = vunpack.c.l.b16 %v27
  %v83 = vunpack.c.l.b16 %v28
  %v84 = vunpack.c.l.b16 %v29
  %v85 = vunpack.c.l.b16 %v30
  %v86 = vunpack.c.l.b16 %v31
  %v87 = vunpack.c.l.b16 %v32
  %v88 = vunpack.c.l.b16 %v33
  %v89 = vunpack.c.l.b16 %v34
  %v90 = vunpack.c.l.b16 %v35
  %v91 = vunpack.c.l.b16 %v36
  %v92 = vunpack.c.l.b16 %v37
  %v93 = vunpack.c.l.b16 %v38
  %v94 = vunpack.c.l.b16 %v39
  %v95 = vunpack.c.l.b16 %v40
  %v96 = vunpack.c.l.b16 %v41
  %v97 = vunpack.c.l.b16 %v42
  %v98 = vpack.c.b16 %v75, %v74
  %v99 = vpack.c.b16 %v77, %v76
  %v100 = vpack.c.b16 %v79, %v78
  %v101 = vpack.c.b16 %v81, %v80
  %v102 = vpack.c.b16 %v83, %v82
  %v103 = vpack.c.b16 %v85, %v84
  %v104 = vpack.c.b16 %v87, %v86
  %v105 = vpack.c.b16 %v89, %v88
  %v106 = vpack.c.b16 %v91, %v90
  %v107 = vpack.c.b16 %v93, %v92
  %v108 = vpack.c.b16 %v95, %v94
  %v109 = vpack.c.b16 %v97, %v96
  %vm122 = vcmask 523264
  %v124 = vsel %vm122, %v18, 0
  %126 = vmatprep.subr.bf16.mxu0 0
  %127 = vmatpush1.bf16.msra.mxu0 %v98
  %128 = vmatprep.subr.bf16.mxu0 0
  %129 = vmatpush1.bf16.msra.mxu0 %v99
  %130 = vmatprep.subr.bf16.mxu0 0
  %131 = vmatpush1.bf16.msra.mxu0 %v100
  %132 = vmatprep.subr.bf16.mxu0 0
  %133 = vmatpush1.bf16.msra.mxu0 %v101
  %134 = vmatprep.subr.bf16.mxu0 0
  %135 = vmatpush1.bf16.msra.mxu0 %v102
  %136 = vmatprep.subr.bf16.mxu0 0
  %137 = vmatpush1.bf16.msra.mxu0 %v103
  %138 = vmatprep.subr.bf16.mxu0 0
  %139 = vmatpush1.bf16.msra.mxu0 %v104
  %140 = vmatprep.subr.bf16.mxu0 0
  %141 = vmatpush1.bf16.msra.mxu0 %v105
  %142 = vmatprep.subr.bf16.mxu0 0
  %143 = vmatpush1.bf16.msra.mxu0 %v106
  %144 = vmatprep.subr.bf16.mxu0 0
  %145 = vmatpush1.bf16.msra.mxu0 %v107
  %146 = vmatprep.subr.bf16.mxu0 0
  %147 = vmatpush1.bf16.msra.mxu0 %v108
  %148 = vmatprep.subr.bf16.mxu0 0
  %149 = vmatpush1.bf16.msra.mxu0 %v109
  %150 = vmatprep.subr.bf16.mxu0 0
  %151 = vmatpush1.bf16.msra.mxu0 0
  %152 = vmatprep.subr.bf16.mxu0 0
  %153 = vmatpush1.bf16.msra.mxu0 0
  %154 = vmatprep.subr.bf16.mxu0 0
  %155 = vmatpush1.bf16.msra.mxu0 0
  %156 = vmatprep.subr.bf16.mxu0 0
  %157 = vmatpush1.bf16.msra.mxu0 0
  %158 = vmatprep.mubr.bf16.mxu0 %v124
  %159 = vmatmul.mubr.bf16.gmra.mrb[0].mxu0 %v17
  %v160 = vpop.f32.mrb[0].mxu0
  %v161 = vadd.f32 %v48, %v160
  %v162 = vpop.f32.mrb[0].mxu0
  %v163 = vpop.f32.mrb[0].mxu0
  %v164 = vpop.f32.mrb[0].mxu0
  %165 = vdwg.mxu0
  %vm166 = vcmask 261120
  %167 = vst.msk [vmem:[%s3] sm:$0xff] %vm166, %v161
  // Predicated region
  $region14: #{vit_forward.3} parent=0 // pred_check
    _
  $region15: #{vit_forward.3} parent=0 // pred_check_branch
    %169 = sbr.rel (0) target = $region17
  $region16: #{vit_forward.3} parent=0 // pred_region
    _
  $region17: #{vit_forward.3} parent=0 // pred_fallthru
    _
  // Predicated region
  $region18: #{vit_forward.3} parent=0 // pred_check
    _
  $region19: #{vit_forward.3} parent=0 // pred_check_branch
    %171 = sbr.rel (0) target = $region21
  $region20: #{vit_forward.3} parent=0 // pred_region
    _
  $region21: #{vit_forward.3} parent=0 // pred_fallthru
    _

// kernel: vit_forward.4
$region0: #{vit_forward.4}
  #allocation0 [shape = 'u32[]', space=smem, size = 0x4, offset = 0x4, fixed_abs, tag = 'smem constant byte address 0x4 - core index']
  #allocation1 [shape = 'u32[144,128]{1,0:T(1,128)}', space=vmem, size = 0x12000, scoped, tag = 'internal scratch']
  #allocation2 [shape = 'f32[5,32]{1,0:T(8,128)}', space=vmem, size = 0x1000, scoped, tag = 'scratch operand']
  %s0 = inlined_call_operand.vmem [shape: f32[2,5,32], index: 0, kind: input, shape index: {}]
  %s1 = inlined_call_operand.vmem [shape: f32[2,1,32], index: 1, kind: input, shape index: {}]
  %s2 = inlined_call_operand.vmem [shape: f32[2,1,32], index: 2, kind: input, shape index: {}]
  %s3 = inlined_call_operand.vmem [shape: bf16[2,2,32,48], index: 3, kind: input, shape index: {}]
  %s4 = inlined_call_operand.vmem [shape: f32[2,2,1,48], index: 4, kind: input, shape index: {}]
  %s5 = inlined_call_operand.vmem [shape: bf16[2,2,16,32], index: 5, kind: input, shape index: {}]
  %s6 = inlined_call_operand.vmem [shape: f32[2,1,32], index: 6, kind: input, shape index: {}]
  %s7 = inlined_call_operand.vmem [shape: f32[2,1,32], index: 7, kind: input, shape index: {}]
  %s8 = inlined_call_operand.vmem [shape: f32[2,1,32], index: 8, kind: input, shape index: {}]
  %s9 = inlined_call_operand.vmem [shape: bf16[2,32,64], index: 9, kind: input, shape index: {}]
  %s10 = inlined_call_operand.vmem [shape: f32[2,1,64], index: 10, kind: input, shape index: {}]
  %s11 = inlined_call_operand.vmem [shape: bf16[2,64,32], index: 11, kind: input, shape index: {}]
  %s12 = inlined_call_operand.vmem [shape: f32[2,1,32], index: 12, kind: input, shape index: {}]
  %s13 = inlined_call_operand.vmem [shape: f32[2,5,32], index: 13, kind: output, shape index: {}]
  %s14 = sld [smem:[#allocation0]]
  $region93: #{vit_forward.4} parent=0
    _
  %s16 = ssub.s32 1, %s14
  %s17 = scalar_select 0, %s16, %s14
  loop: start=0, step=1, limit=6
  $region2: #{vit_forward.4} parent=0 // loop_pre_header
    _
  $region3: #{vit_forward.4} parent=0 // loop_header
    %s19 = sphi 0, %s23
    %p20 = scmp.ge.s32.totalorder %s19, 6
    %s26 = sphi 0, %s38
    %s27 = sphi 0, %s34
    %s28 = sphi 0, %s26
    %s29 = sphi 0, %s27
    %s30 = sphi 0, %s28
    %s31 = sphi 0, %s29
    %s41 = sphi 0, %s43
    %s44 = sphi 0, %s41
    %s45 = sphi 0, %s44
    %s61 = sphi 0, %s45
    %s67 = sphi 0, %s69
    %s70 = sphi 0, %s67
    %s71 = sphi 0, %s70
    %s87 = sphi 0, %s71
    %s93 = sphi 0, %s95
    %s96 = sphi 0, %s93
    %s97 = sphi 0, %s96
    %s113 = sphi 0, %s97
    %s119 = sphi 0, %s121
    %s122 = sphi 0, %s119
    %s123 = sphi 0, %s122
    %s139 = sphi 0, %s123
    %s145 = sphi 0, %s147
    %s148 = sphi 0, %s145
    %s149 = sphi 0, %s148
    %s165 = sphi 0, %s149
    %s171 = sphi 0, %s173
    %s174 = sphi 0, %s171
    %s175 = sphi 0, %s174
    %s191 = sphi 0, %s175
    %s197 = sphi 0, %s199
    %s200 = sphi 0, %s197
    %s201 = sphi 0, %s200
    %s217 = sphi 0, %s201
    %s223 = sphi 0, %s225
    %s226 = sphi 0, %s223
    %s227 = sphi 0, %s226
    %s243 = sphi 0, %s227
    %s249 = sphi 0, %s251
    %s252 = sphi 0, %s249
    %s253 = sphi 0, %s252
    %s269 = sphi 0, %s253
    %s275 = sphi 0, %s277
    %s278 = sphi 0, %s275
    %s279 = sphi 0, %s278
    %s295 = sphi 0, %s279
    %s301 = sphi 0, %s303
    %s304 = sphi 0, %s301
    %s305 = sphi 0, %s304
    %s321 = sphi 0, %s305
    %s327 = sphi 0, %s329
    %s330 = sphi 0, %s327
    %s331 = sphi 0, %s330
    %s347 = sphi 0, %s331
    %s353 = sphi 0, %s355
    %s356 = sphi 0, %s353
    %s357 = sphi 0, %s356
    %s373 = sphi 0, %s357
    %s379 = sphi 0, %s381
    %s382 = sphi 0, %s379
    %s383 = sphi 0, %s382
    %s399 = sphi 0, %s383
  $region4: #{vit_forward.4} parent=0 // loop_header_branch
    %22 = sbr.rel (%p20) target = $region8
  $region5: #{vit_forward.4} parent=0 // loop_body
    %s24 = ssub.s32 %s19, 1
    %s25 = ssub.s32 %s19, 2
    %s32 = sadd.s32 1, %s27
    %p33 = scmp.ge.s32.totalorder %s32, 2
    %s34 = scalar_select %p33, 0, %s32
    %s35 = sadd.s32 1, %s26
    %s36 = scalar_select %p33, %s35, %s26
    %p37 = scmp.ge.s32.totalorder %s36, 2
    %s38 = scalar_select %p37, 0, %s36
    %s39 = ssub.s32 %s26, %s38
    %p40 = scmp.eq.s32.totalorder %s39, 0
    %s42 = sadd.s32 %s41, 1
    %s43 = scalar_select %p40, %s41, %s42
    %p46 = pneg %p40
    %p47 = scmp.eq.s32.totalorder %s19, 3
    %p48 = por %p46, %p47
    %p49 = scmp.ne.s32.totalorder %s41, %s44
    %p50 = scmp.eq.s32.totalorder %s19, 0
    %p51 = por %p49, %p50
    %p52 = scmp.ne.s32.totalorder %s41, %s44
    %p53 = scmp.eq.s32.totalorder %s24, 3
    %p54 = por %p52, %p53
    %p55 = scmp.ne.s32.totalorder %s44, %s45
    %p56 = scmp.eq.s32.totalorder %s24, 0
    %p57 = por %p55, %p56
    %p58 = scmp.ne.s32.totalorder %s44, %s45
    %p59 = scmp.eq.s32.totalorder %s25, 3
    %p60 = por %p58, %p59
    %p62 = scmp.ne.s32.totalorder %s45, %s61
    %p63 = scmp.eq.s32.totalorder %s25, 0
    %p64 = por %p62, %p63
    %s65 = ssub.s32 %s27, %s34
    %p66 = scmp.eq.s32.totalorder %s65, 0
    %s68 = sadd.s32 %s67, 1
    %s69 = scalar_select %p66, %s67, %s68
    %p72 = pneg %p66
    %p73 = scmp.eq.s32.totalorder %s19, 3
    %p74 = por %p72, %p73
    %p75 = scmp.ne.s32.totalorder %s67, %s70
    %p76 = scmp.eq.s32.totalorder %s19, 0
    %p77 = por %p75, %p76
    %p78 = scmp.ne.s32.totalorder %s67, %s70
    %p79 = scmp.eq.s32.totalorder %s24, 3
    %p80 = por %p78, %p79
    %p81 = scmp.ne.s32.totalorder %s70, %s71
    %p82 = scmp.eq.s32.totalorder %s24, 0
    %p83 = por %p81, %p82
    %p84 = scmp.ne.s32.totalorder %s70, %s71
    %p85 = scmp.eq.s32.totalorder %s25, 3
    %p86 = por %p84, %p85
    %p88 = scmp.ne.s32.totalorder %s71, %s87
    %p89 = scmp.eq.s32.totalorder %s25, 0
    %p90 = por %p88, %p89
    %s91 = ssub.s32 %s27, %s34
    %p92 = scmp.eq.s32.totalorder %s91, 0
    %s94 = sadd.s32 %s93, 1
    %s95 = scalar_select %p92, %s93, %s94
    %p98 = pneg %p92
    %p99 = scmp.eq.s32.totalorder %s19, 3
    %p100 = por %p98, %p99
    %p101 = scmp.ne.s32.totalorder %s93, %s96
    %p102 = scmp.eq.s32.totalorder %s19, 0
    %p103 = por %p101, %p102
    %p104 = scmp.ne.s32.totalorder %s93, %s96
    %p105 = scmp.eq.s32.totalorder %s24, 3
    %p106 = por %p104, %p105
    %p107 = scmp.ne.s32.totalorder %s96, %s97
    %p108 = scmp.eq.s32.totalorder %s24, 0
    %p109 = por %p107, %p108
    %p110 = scmp.ne.s32.totalorder %s96, %s97
    %p111 = scmp.eq.s32.totalorder %s25, 3
    %p112 = por %p110, %p111
    %p114 = scmp.ne.s32.totalorder %s97, %s113
    %p115 = scmp.eq.s32.totalorder %s25, 0
    %p116 = por %p114, %p115
    %s117 = ssub.s32 %s27, %s34
    %p118 = scmp.eq.s32.totalorder %s117, 0
    %s120 = sadd.s32 %s119, 1
    %s121 = scalar_select %p118, %s119, %s120
    %p124 = pneg %p118
    %p125 = scmp.eq.s32.totalorder %s19, 3
    %p126 = por %p124, %p125
    %p127 = scmp.ne.s32.totalorder %s119, %s122
    %p128 = scmp.eq.s32.totalorder %s19, 0
    %p129 = por %p127, %p128
    %p130 = scmp.ne.s32.totalorder %s119, %s122
    %p131 = scmp.eq.s32.totalorder %s24, 3
    %p132 = por %p130, %p131
    %p133 = scmp.ne.s32.totalorder %s122, %s123
    %p134 = scmp.eq.s32.totalorder %s24, 0
    %p135 = por %p133, %p134
    %p136 = scmp.ne.s32.totalorder %s122, %s123
    %p137 = scmp.eq.s32.totalorder %s25, 3
    %p138 = por %p136, %p137
    %p140 = scmp.ne.s32.totalorder %s123, %s139
    %p141 = scmp.eq.s32.totalorder %s25, 0
    %p142 = por %p140, %p141
    %s143 = ssub.s32 %s27, %s34
    %p144 = scmp.eq.s32.totalorder %s143, 0
    %s146 = sadd.s32 %s145, 1
    %s147 = scalar_select %p144, %s145, %s146
    %p150 = pneg %p144
    %p151 = scmp.eq.s32.totalorder %s19, 3
    %p152 = por %p150, %p151
    %p153 = scmp.ne.s32.totalorder %s145, %s148
    %p154 = scmp.eq.s32.totalorder %s19, 0
    %p155 = por %p153, %p154
    %p156 = scmp.ne.s32.totalorder %s145, %s148
    %p157 = scmp.eq.s32.totalorder %s24, 3
    %p158 = por %p156, %p157
    %p159 = scmp.ne.s32.totalorder %s148, %s149
    %p160 = scmp.eq.s32.totalorder %s24, 0
    %p161 = por %p159, %p160
    %p162 = scmp.ne.s32.totalorder %s148, %s149
    %p163 = scmp.eq.s32.totalorder %s25, 3
    %p164 = por %p162, %p163
    %p166 = scmp.ne.s32.totalorder %s149, %s165
    %p167 = scmp.eq.s32.totalorder %s25, 0
    %p168 = por %p166, %p167
    %s169 = ssub.s32 %s27, %s34
    %p170 = scmp.eq.s32.totalorder %s169, 0
    %s172 = sadd.s32 %s171, 1
    %s173 = scalar_select %p170, %s171, %s172
    %p176 = pneg %p170
    %p177 = scmp.eq.s32.totalorder %s19, 3
    %p178 = por %p176, %p177
    %p179 = scmp.ne.s32.totalorder %s171, %s174
    %p180 = scmp.eq.s32.totalorder %s19, 0
    %p181 = por %p179, %p180
    %p182 = scmp.ne.s32.totalorder %s171, %s174
    %p183 = scmp.eq.s32.totalorder %s24, 3
    %p184 = por %p182, %p183
    %p185 = scmp.ne.s32.totalorder %s174, %s175
    %p186 = scmp.eq.s32.totalorder %s24, 0
    %p187 = por %p185, %p186
    %p188 = scmp.ne.s32.totalorder %s174, %s175
    %p189 = scmp.eq.s32.totalorder %s25, 3
    %p190 = por %p188, %p189
    %p192 = scmp.ne.s32.totalorder %s175, %s191
    %p193 = scmp.eq.s32.totalorder %s25, 0
    %p194 = por %p192, %p193
    %s195 = ssub.s32 %s27, %s34
    %p196 = scmp.eq.s32.totalorder %s195, 0
    %s198 = sadd.s32 %s197, 1
    %s199 = scalar_select %p196, %s197, %s198
    %p202 = pneg %p196
    %p203 = scmp.eq.s32.totalorder %s19, 3
    %p204 = por %p202, %p203
    %p205 = scmp.ne.s32.totalorder %s197, %s200
    %p206 = scmp.eq.s32.totalorder %s19, 0
    %p207 = por %p205, %p206
    %p208 = scmp.ne.s32.totalorder %s197, %s200
    %p209 = scmp.eq.s32.totalorder %s24, 3
    %p210 = por %p208, %p209
    %p211 = scmp.ne.s32.totalorder %s200, %s201
    %p212 = scmp.eq.s32.totalorder %s24, 0
    %p213 = por %p211, %p212
    %p214 = scmp.ne.s32.totalorder %s200, %s201
    %p215 = scmp.eq.s32.totalorder %s25, 3
    %p216 = por %p214, %p215
    %p218 = scmp.ne.s32.totalorder %s201, %s217
    %p219 = scmp.eq.s32.totalorder %s25, 0
    %p220 = por %p218, %p219
    %s221 = ssub.s32 %s27, %s34
    %p222 = scmp.eq.s32.totalorder %s221, 0
    %s224 = sadd.s32 %s223, 1
    %s225 = scalar_select %p222, %s223, %s224
    %p228 = pneg %p222
    %p229 = scmp.eq.s32.totalorder %s19, 3
    %p230 = por %p228, %p229
    %p231 = scmp.ne.s32.totalorder %s223, %s226
    %p232 = scmp.eq.s32.totalorder %s19, 0
    %p233 = por %p231, %p232
    %p234 = scmp.ne.s32.totalorder %s223, %s226
    %p235 = scmp.eq.s32.totalorder %s24, 3
    %p236 = por %p234, %p235
    %p237 = scmp.ne.s32.totalorder %s226, %s227
    %p238 = scmp.eq.s32.totalorder %s24, 0
    %p239 = por %p237, %p238
    %p240 = scmp.ne.s32.totalorder %s226, %s227
    %p241 = scmp.eq.s32.totalorder %s25, 3
    %p242 = por %p240, %p241
    %p244 = scmp.ne.s32.totalorder %s227, %s243
    %p245 = scmp.eq.s32.totalorder %s25, 0
    %p246 = por %p244, %p245
    %s247 = ssub.s32 %s27, %s34
    %p248 = scmp.eq.s32.totalorder %s247, 0
    %s250 = sadd.s32 %s249, 1
    %s251 = scalar_select %p248, %s249, %s250
    %p254 = pneg %p248
    %p255 = scmp.eq.s32.totalorder %s19, 3
    %p256 = por %p254, %p255
    %p257 = scmp.ne.s32.totalorder %s249, %s252
    %p258 = scmp.eq.s32.totalorder %s19, 0
    %p259 = por %p257, %p258
    %p260 = scmp.ne.s32.totalorder %s249, %s252
    %p261 = scmp.eq.s32.totalorder %s24, 3
    %p262 = por %p260, %p261
    %p263 = scmp.ne.s32.totalorder %s252, %s253
    %p264 = scmp.eq.s32.totalorder %s24, 0
    %p265 = por %p263, %p264
    %p266 = scmp.ne.s32.totalorder %s252, %s253
    %p267 = scmp.eq.s32.totalorder %s25, 3
    %p268 = por %p266, %p267
    %p270 = scmp.ne.s32.totalorder %s253, %s269
    %p271 = scmp.eq.s32.totalorder %s25, 0
    %p272 = por %p270, %p271
    %s273 = ssub.s32 %s27, %s34
    %p274 = scmp.eq.s32.totalorder %s273, 0
    %s276 = sadd.s32 %s275, 1
    %s277 = scalar_select %p274, %s275, %s276
    %p280 = pneg %p274
    %p281 = scmp.eq.s32.totalorder %s19, 3
    %p282 = por %p280, %p281
    %p283 = scmp.ne.s32.totalorder %s275, %s278
    %p284 = scmp.eq.s32.totalorder %s19, 0
    %p285 = por %p283, %p284
    %p286 = scmp.ne.s32.totalorder %s275, %s278
    %p287 = scmp.eq.s32.totalorder %s24, 3
    %p288 = por %p286, %p287
    %p289 = scmp.ne.s32.totalorder %s278, %s279
    %p290 = scmp.eq.s32.totalorder %s24, 0
    %p291 = por %p289, %p290
    %p292 = scmp.ne.s32.totalorder %s278, %s279
    %p293 = scmp.eq.s32.totalorder %s25, 3
    %p294 = por %p292, %p293
    %p296 = scmp.ne.s32.totalorder %s279, %s295
    %p297 = scmp.eq.s32.totalorder %s25, 0
    %p298 = por %p296, %p297
    %s299 = ssub.s32 %s27, %s34
    %p300 = scmp.eq.s32.totalorder %s299, 0
    %s302 = sadd.s32 %s301, 1
    %s303 = scalar_select %p300, %s301, %s302
    %p306 = pneg %p300
    %p307 = scmp.eq.s32.totalorder %s19, 3
    %p308 = por %p306, %p307
    %p309 = scmp.ne.s32.totalorder %s301, %s304
    %p310 = scmp.eq.s32.totalorder %s19, 0
    %p311 = por %p309, %p310
    %p312 = scmp.ne.s32.totalorder %s301, %s304
    %p313 = scmp.eq.s32.totalorder %s24, 3
    %p314 = por %p312, %p313
    %p315 = scmp.ne.s32.totalorder %s304, %s305
    %p316 = scmp.eq.s32.totalorder %s24, 0
    %p317 = por %p315, %p316
    %p318 = scmp.ne.s32.totalorder %s304, %s305
    %p319 = scmp.eq.s32.totalorder %s25, 3
    %p320 = por %p318, %p319
    %p322 = scmp.ne.s32.totalorder %s305, %s321
    %p323 = scmp.eq.s32.totalorder %s25, 0
    %p324 = por %p322, %p323
    %s325 = ssub.s32 %s27, %s34
    %p326 = scmp.eq.s32.totalorder %s325, 0
    %s328 = sadd.s32 %s327, 1
    %s329 = scalar_select %p326, %s327, %s328
    %p332 = pneg %p326
    %p333 = scmp.eq.s32.totalorder %s19, 3
    %p334 = por %p332, %p333
    %p335 = scmp.ne.s32.totalorder %s327, %s330
    %p336 = scmp.eq.s32.totalorder %s19, 0
    %p337 = por %p335, %p336
    %p338 = scmp.ne.s32.totalorder %s327, %s330
    %p339 = scmp.eq.s32.totalorder %s24, 3
    %p340 = por %p338, %p339
    %p341 = scmp.ne.s32.totalorder %s330, %s331
    %p342 = scmp.eq.s32.totalorder %s24, 0
    %p343 = por %p341, %p342
    %p344 = scmp.ne.s32.totalorder %s330, %s331
    %p345 = scmp.eq.s32.totalorder %s25, 3
    %p346 = por %p344, %p345
    %p348 = scmp.ne.s32.totalorder %s331, %s347
    %p349 = scmp.eq.s32.totalorder %s25, 0
    %p350 = por %p348, %p349
    %s351 = ssub.s32 %s27, %s34
    %p352 = scmp.eq.s32.totalorder %s351, 0
    %s354 = sadd.s32 %s353, 1
    %s355 = scalar_select %p352, %s353, %s354
    %p358 = pneg %p352
    %p359 = scmp.eq.s32.totalorder %s19, 3
    %p360 = por %p358, %p359
    %p361 = scmp.ne.s32.totalorder %s353, %s356
    %p362 = scmp.eq.s32.totalorder %s19, 0
    %p363 = por %p361, %p362
    %p364 = scmp.ne.s32.totalorder %s353, %s356
    %p365 = scmp.eq.s32.totalorder %s24, 3
    %p366 = por %p364, %p365
    %p367 = scmp.ne.s32.totalorder %s356, %s357
    %p368 = scmp.eq.s32.totalorder %s24, 0
    %p369 = por %p367, %p368
    %p370 = scmp.ne.s32.totalorder %s356, %s357
    %p371 = scmp.eq.s32.totalorder %s25, 3
    %p372 = por %p370, %p371
    %p374 = scmp.ne.s32.totalorder %s357, %s373
    %p375 = scmp.eq.s32.totalorder %s25, 0
    %p376 = por %p374, %p375
    %s377 = ssub.s32 %s26, %s38
    %p378 = scmp.eq.s32.totalorder %s377, 0
    %s380 = sadd.s32 %s379, 1
    %s381 = scalar_select %p378, %s379, %s380
    %p384 = pneg %p378
    %p385 = scmp.eq.s32.totalorder %s19, 3
    %p386 = por %p384, %p385
    %p387 = scmp.ne.s32.totalorder %s379, %s382
    %p388 = scmp.eq.s32.totalorder %s19, 0
    %p389 = por %p387, %p388
    %p390 = scmp.ne.s32.totalorder %s379, %s382
    %p391 = scmp.eq.s32.totalorder %s24, 3
    %p392 = por %p390, %p391
    %p393 = scmp.ne.s32.totalorder %s382, %s383
    %p394 = scmp.eq.s32.totalorder %s24, 0
    %p395 = por %p393, %p394
    %p396 = scmp.ne.s32.totalorder %s382, %s383
    %p397 = scmp.eq.s32.totalorder %s25, 3
    %p398 = por %p396, %p397
    %p400 = scmp.ne.s32.totalorder %s383, %s399
    %p401 = scmp.eq.s32.totalorder %s25, 0
    %p402 = por %p400, %p401
    %p403 = scmp.le.s32.totalorder 1, %s19
    %p404 = scmp.lt.s32.totalorder %s19, 5
    %p405 = pnand %p403, %p404
    %p406 = pneg %p405
    // Predicated region
    $region9: #{vit_forward.4} parent=5 // pred_check
      _
    $region10: #{vit_forward.4} parent=5 // pred_check_branch
      %408 = sbr.rel (%p405) target = $region12
    $region11: #{vit_forward.4} parent=5 // pred_region
      %s409 = ssub.s32 %s19, 1
    $region12: #{vit_forward.4} parent=5 // pred_fallthru
      _
    %p410 = scmp.lt.s32.totalorder %s19, 4
    // Predicated region
    $region13: #{vit_forward.4} parent=5 // pred_check
      %p411 = pneg %p410
    $region14: #{vit_forward.4} parent=5 // pred_check_branch
      %413 = sbr.rel (%p411) target = $region16
    $region15: #{vit_forward.4} parent=5 // pred_region
      // Predicated region
      $region17: #{vit_forward.4} parent=15 // pred_check
        %p414 = pneg %p51
      $region18: #{vit_forward.4} parent=15 // pred_check_branch
        %416 = sbr.rel (%p414) target = $region20
      $region19: #{vit_forward.4} parent=15 // pred_region
        %p417 = scmp.lt.s32.totalorder %s26, 1
        %s418 = scalar_select %p417, %s26, 1
        %s419 = smul.addr %s418, 8
        %s420 = scalar_lea.vmem %s0, %s419
      $region20: #{vit_forward.4} parent=15 // pred_fallthru
        _
      // Predicated region
      $region21: #{vit_forward.4} parent=15 // pred_check
        %p421 = pneg %p77
      $region22: #{vit_forward.4} parent=15 // pred_check_branch
        %423 = sbr.rel (%p421) target = $region24
      $region23: #{vit_forward.4} parent=15 // pred_region
        %p424 = scmp.lt.s32.totalorder %s27, 1
        %s425 = scalar_select %p424, %s27, 1
        %s426 = scalar_lea.vmem %s1, %s425
      $region24: #{vit_forward.4} parent=15 // pred_fallthru
        _
      // Predicated region
      $region25: #{vit_forward.4} parent=15 // pred_check
        %p427 = pneg %p103
      $region26: #{vit_forward.4} parent=15 // pred_check_branch
        %429 = sbr.rel (%p427) target = $region28
      $region27: #{vit_forward.4} parent=15 // pred_region
        %p430 = scmp.lt.s32.totalorder %s27, 1
        %s431 = scalar_select %p430, %s27, 1
        %s432 = scalar_lea.vmem %s2, %s431
      $region28: #{vit_forward.4} parent=15 // pred_fallthru
        _
      // Predicated region
      $region29: #{vit_forward.4} parent=15 // pred_check
        %p433 = pneg %p129
      $region30: #{vit_forward.4} parent=15 // pred_check_branch
        %435 = sbr.rel (%p433) target = $region32
      $region31: #{vit_forward.4} parent=15 // pred_region
        %p436 = scmp.lt.s32.totalorder %s27, 1
        %s437 = scalar_select %p436, %s27, 1
        %s438 = smul.addr %s437, 8
        %s439 = smul.addr %s438, 4
        %s440 = scalar_lea.vmem %s3, %s439
      $region32: #{vit_forward.4} parent=15 // pred_fallthru
        _
      // Predicated region
      $region33: #{vit_forward.4} parent=15 // pred_check
        %p441 = pneg %p155
      $region34: #{vit_forward.4} parent=15 // pred_check_branch
        %443 = sbr.rel (%p441) target = $region36
      $region35: #{vit_forward.4} parent=15 // pred_region
        %p444 = scmp.lt.s32.totalorder %s27, 1
        %s445 = scalar_select %p444, %s27, 1
        %s446 = smul.addr %s445, 2
        %s447 = scalar_lea.vmem %s4, %s446
      $region36: #{vit_forward.4} parent=15 // pred_fallthru
        _
      // Predicated region
      $region37: #{vit_forward.4} parent=15 // pred_check
        %p448 = pneg %p181
      $region38: #{vit_forward.4} parent=15 // pred_check_branch
        %450 = sbr.rel (%p448) target = $region40
      $region39: #{vit_forward.4} parent=15 // pred_region
        %p451 = scmp.lt.s32.totalorder %s27, 1
        %s452 = scalar_select %p451, %s27, 1
        %s453 = smul.addr %s452, 4
        %s454 = smul.addr %s453, 4
        %s455 = scalar_lea.vmem %s5, %s454
      $region40: #{vit_forward.4} parent=15 // pred_fallthru
        _
      // Predicated region
      $region41: #{vit_forward.4} parent=15 // pred_check
        %p456 = pneg %p207
      $region42: #{vit_forward.4} parent=15 // pred_check_branch
        %458 = sbr.rel (%p456) target = $region44
      $region43: #{vit_forward.4} parent=15 // pred_region
        %p459 = scmp.lt.s32.totalorder %s27, 1
        %s460 = scalar_select %p459, %s27, 1
        %s461 = scalar_lea.vmem %s6, %s460
      $region44: #{vit_forward.4} parent=15 // pred_fallthru
        _
      // Predicated region
      $region45: #{vit_forward.4} parent=15 // pred_check
        %p462 = pneg %p233
      $region46: #{vit_forward.4} parent=15 // pred_check_branch
        %464 = sbr.rel (%p462) target = $region48
      $region47: #{vit_forward.4} parent=15 // pred_region
        %p465 = scmp.lt.s32.totalorder %s27, 1
        %s466 = scalar_select %p465, %s27, 1
        %s467 = scalar_lea.vmem %s7, %s466
      $region48: #{vit_forward.4} parent=15 // pred_fallthru
        _
      // Predicated region
      $region49: #{vit_forward.4} parent=15 // pred_check
        %p468 = pneg %p259
      $region50: #{vit_forward.4} parent=15 // pred_check_branch
        %470 = sbr.rel (%p468) target = $region52
      $region51: #{vit_forward.4} parent=15 // pred_region
        %p471 = scmp.lt.s32.totalorder %s27, 1
        %s472 = scalar_select %p471, %s27, 1
        %s473 = scalar_lea.vmem %s8, %s472
      $region52: #{vit_forward.4} parent=15 // pred_fallthru
        _
      // Predicated region
      $region53: #{vit_forward.4} parent=15 // pred_check
        %p474 = pneg %p285
      $region54: #{vit_forward.4} parent=15 // pred_check_branch
        %476 = sbr.rel (%p474) target = $region56
      $region55: #{vit_forward.4} parent=15 // pred_region
        %p477 = scmp.lt.s32.totalorder %s27, 1
        %s478 = scalar_select %p477, %s27, 1
        %s479 = smul.addr %s478, 4
        %s480 = smul.addr %s479, 4
        %s481 = scalar_lea.vmem %s9, %s480
      $region56: #{vit_forward.4} parent=15 // pred_fallthru
        _
      // Predicated region
      $region57: #{vit_forward.4} parent=15 // pred_check
        %p482 = pneg %p311
      $region58: #{vit_forward.4} parent=15 // pred_check_branch
        %484 = sbr.rel (%p482) target = $region60
      $region59: #{vit_forward.4} parent=15 // pred_region
        %p485 = scmp.lt.s32.totalorder %s27, 1
        %s486 = scalar_select %p485, %s27, 1
        %s487 = scalar_lea.vmem %s10, %s486
      $region60: #{vit_forward.4} parent=15 // pred_fallthru
        _
      // Predicated region
      $region61: #{vit_forward.4} parent=15 // pred_check
        %p488 = pneg %p337
      $region62: #{vit_forward.4} parent=15 // pred_check_branch
        %490 = sbr.rel (%p488) target = $region64
      $region63: #{vit_forward.4} parent=15 // pred_region
        %p491 = scmp.lt.s32.totalorder %s27, 1
        %s492 = scalar_select %p491, %s27, 1
        %s493 = smul.addr %s492, 8
        %s494 = smul.addr %s493, 4
        %s495 = scalar_lea.vmem %s11, %s494
      $region64: #{vit_forward.4} parent=15 // pred_fallthru
        _
      // Predicated region
      $region65: #{vit_forward.4} parent=15 // pred_check
        %p496 = pneg %p363
      $region66: #{vit_forward.4} parent=15 // pred_check_branch
        %498 = sbr.rel (%p496) target = $region68
      $region67: #{vit_forward.4} parent=15 // pred_region
        %p499 = scmp.lt.s32.totalorder %s27, 1
        %s500 = scalar_select %p499, %s27, 1
        %s501 = scalar_lea.vmem %s12, %s500
      $region68: #{vit_forward.4} parent=15 // pred_fallthru
        _
    $region16: #{vit_forward.4} parent=5 // pred_fallthru
      _
    %p502 = scmp.le.s32.totalorder 1, %s19
    %p503 = scmp.lt.s32.totalorder %s19, 5
    %p504 = pnand %p502, %p503
    %p505 = pneg %p504
    // Predicated region
    $region69: #{vit_forward.4} parent=5 // pred_check
      _
    $region70: #{vit_forward.4} parent=5 // pred_check_branch
      %507 = sbr.rel (%p504) target = $region72
    $region71: #{vit_forward.4} parent=5 // pred_region
      %s508 = ssub.s32 %s19, 1
      %p509 = scmp.lt.s32.totalorder %s28, 1
      %s510 = scalar_select %p509, %s28, 1
      %s511 = smul.addr %s510, 8
      %s512 = scalar_lea.vmem %s0, %s511
      %p513 = pneg %p57
      %p514 = pneg %p54
      %p515 = scmp.lt.s32.totalorder %s29, 1
      %s516 = scalar_select %p515, %s29, 1
      %s517 = scalar_lea.vmem %s1, %s516
      %p518 = pneg %p83
      %p519 = pneg %p80
      %p520 = scmp.lt.s32.totalorder %s29, 1
      %s521 = scalar_select %p520, %s29, 1
      %s522 = scalar_lea.vmem %s2, %s521
      %p523 = pneg %p109
      %p524 = pneg %p106
      %p525 = scmp.lt.s32.totalorder %s29, 1
      %s526 = scalar_select %p525, %s29, 1
      %s527 = smul.addr %s526, 8
      %s528 = smul.addr %s527, 4
      %s529 = scalar_lea.vmem %s3, %s528
      %p530 = pneg %p135
      %p531 = pneg %p132
      %p532 = scmp.lt.s32.totalorder %s29, 1
      %s533 = scalar_select %p532, %s29, 1
      %s534 = smul.addr %s533, 2
      %s535 = scalar_lea.vmem %s4, %s534
      %p536 = pneg %p161
      %p537 = pneg %p158
      %p538 = scmp.lt.s32.totalorder %s29, 1
      %s539 = scalar_select %p538, %s29, 1
      %s540 = smul.addr %s539, 4
      %s541 = smul.addr %s540, 4
      %s542 = scalar_lea.vmem %s5, %s541
      %p543 = pneg %p187
      %p544 = pneg %p184
      %p545 = scmp.lt.s32.totalorder %s29, 1
      %s546 = scalar_select %p545, %s29, 1
      %s547 = scalar_lea.vmem %s6, %s546
      %p548 = pneg %p213
      %p549 = pneg %p210
      %p550 = scmp.lt.s32.totalorder %s29, 1
      %s551 = scalar_select %p550, %s29, 1
      %s552 = scalar_lea.vmem %s7, %s551
      %p553 = pneg %p239
      %p554 = pneg %p236
      %p555 = scmp.lt.s32.totalorder %s29, 1
      %s556 = scalar_select %p555, %s29, 1
      %s557 = scalar_lea.vmem %s8, %s556
      %p558 = pneg %p265
      %p559 = pneg %p262
      %p560 = scmp.lt.s32.totalorder %s29, 1
      %s561 = scalar_select %p560, %s29, 1
      %s562 = smul.addr %s561, 4
      %s563 = smul.addr %s562, 4
      %s564 = scalar_lea.vmem %s9, %s563
      %p565 = pneg %p291
      %p566 = pneg %p288
      %p567 = scmp.lt.s32.totalorder %s29, 1
      %s568 = scalar_select %p567, %s29, 1
      %s569 = scalar_lea.vmem %s10, %s568
      %p570 = pneg %p317
      %p571 = pneg %p314
      %p572 = scmp.lt.s32.totalorder %s29, 1
      %s573 = scalar_select %p572, %s29, 1
      %s574 = smul.addr %s573, 8
      %s575 = smul.addr %s574, 4
      %s576 = scalar_lea.vmem %s11, %s575
      %p577 = pneg %p343
      %p578 = pneg %p340
      %p579 = scmp.lt.s32.totalorder %s29, 1
      %s580 = scalar_select %p579, %s29, 1
      %s581 = scalar_lea.vmem %s12, %s580
      %p582 = pneg %p369
      %p583 = pneg %p366
      %p584 = pneg %p395
      %p585 = pneg %p392
      %p586 = scmp.lt.s32.totalorder %s28, 1
      %s587 = scalar_select %p586, %s28, 1
      %s588 = smul.addr %s587, 8
      %s589 = scalar_lea.vmem %s13, %s588
      %p590 = scmp.lt.s32.totalorder %s28, 1
      %s591 = scalar_select %p590, %s28, 1
      %s592 = smul.addr %s591, 8
      %s593 = scalar_lea.vmem %s0, %s592
      %p594 = scmp.lt.s32.totalorder %s29, 1
      %s595 = scalar_select %p594, %s29, 1
      %s596 = scalar_lea.vmem %s1, %s595
      %p597 = scmp.lt.s32.totalorder %s29, 1
      %s598 = scalar_select %p597, %s29, 1
      %s599 = scalar_lea.vmem %s2, %s598
      %p600 = scmp.lt.s32.totalorder %s29, 1
      %s601 = scalar_select %p600, %s29, 1
      %s602 = smul.addr %s601, 8
      %s603 = smul.addr %s602, 4
      %s604 = scalar_lea.vmem %s3, %s603
      %p605 = scmp.lt.s32.totalorder %s29, 1
      %s606 = scalar_select %p605, %s29, 1
      %s607 = smul.addr %s606, 2
      %s608 = scalar_lea.vmem %s4, %s607
      %p609 = scmp.lt.s32.totalorder %s29, 1
      %s610 = scalar_select %p609, %s29, 1
      %s611 = smul.addr %s610, 4
      %s612 = smul.addr %s611, 4
      %s613 = scalar_lea.vmem %s5, %s612
      %p614 = scmp.lt.s32.totalorder %s29, 1
      %s615 = scalar_select %p614, %s29, 1
      %s616 = scalar_lea.vmem %s6, %s615
      %p617 = scmp.lt.s32.totalorder %s29, 1
      %s618 = scalar_select %p617, %s29, 1
      %s619 = scalar_lea.vmem %s7, %s618
      %p620 = scmp.lt.s32.totalorder %s29, 1
      %s621 = scalar_select %p620, %s29, 1
      %s622 = scalar_lea.vmem %s8, %s621
      %p623 = scmp.lt.s32.totalorder %s29, 1
      %s624 = scalar_select %p623, %s29, 1
      %s625 = smul.addr %s624, 4
      %s626 = smul.addr %s625, 4
      %s627 = scalar_lea.vmem %s9, %s626
      %p628 = scmp.lt.s32.totalorder %s29, 1
      %s629 = scalar_select %p628, %s29, 1
      %s630 = scalar_lea.vmem %s10, %s629
      %p631 = scmp.lt.s32.totalorder %s29, 1
      %s632 = scalar_select %p631, %s29, 1
      %s633 = smul.addr %s632, 8
      %s634 = smul.addr %s633, 4
      %s635 = scalar_lea.vmem %s11, %s634
      %p636 = scmp.lt.s32.totalorder %s29, 1
      %s637 = scalar_select %p636, %s29, 1
      %s638 = scalar_lea.vmem %s12, %s637
      %p639 = scmp.lt.s32.totalorder %s28, 1
      %s640 = scalar_select %p639, %s28, 1
      %s641 = smul.addr %s640, 8
      %s642 = scalar_lea.vmem %s13, %s641
      %p644 = scmp.eq.s32.totalorder %s29, 0
      // Predicated region
      $region73: #{vit_forward.4} parent=71 // pred_check
        %p645 = pneg %p644
      $region74: #{vit_forward.4} parent=71 // pred_check_branch
        %647 = sbr.rel (%p645) target = $region76
      $region75: #{vit_forward.4} parent=71 // pred_region
        %v648 = vld [vmem:[%s593] sm:$0x1f]
        %vm649 = vcmask 258048
        %650 = vst.msk [vmem:[#allocation2] sm:$0x1f] %vm649, %v648
      $region76: #{vit_forward.4} parent=71 // pred_fallthru
        _
      %v651 = vld [vmem:[#allocation2] sm:$0x1f]
      %v652 = vld [vmem:[%s596] sm:$0x1]
      %v653 = vld [vmem:[%s599] sm:$0x1]
      %vm654 = vcmask 258048
      %v655 = vsel %vm654, %v651, 0.0
      %656 = vadd.xlane.f32.xlu0 %v655
      %v657 = vpop.xlane.xlu0 %656
      %v658 = vrcp.pop 32.0
      %v659 = vmul.f32 %v657, %v658
      %v660 = vsub.f32 %v651, %v659
      %v661 = vmul.f32 %v660, %v660
      %v662 = vsel %vm654, %v661, 0.0
      %663 = vadd.xlane.f32.xlu0 %v662
      %v664 = vpop.xlane.xlu0 %663
      %v665 = vmul.f32 %v664, %v658
      %v666 = vadd.f32 %v665, 1e-06
      %v667 = vrsqrt.pop %v666
      %v668 = vmul.f32 %v660, %v667
      %v670 = vlaneseq
      %v671 = vshrl.u32 %v670, 7
      %v672 = vsub.s32 0, %v671
      %v673 = vrot.slane %v652, %v672
      %v675 = vmul.f32 %v668, %v673
      %v677 = vlaneseq
      %v678 = vshrl.u32 %v677, 7
      %v679 = vsub.s32 0, %v678
      %v680 = vrot.slane %v653, %v679
      %v682 = vadd.f32 %v675, %v680
      %v683 = vpack.c.bf16 %v682, %v682
      %v684 = vld [vmem:[%s604] sm:$0xf]
      %v685 = vld [vmem:[%s604 + $0x4] sm:$0xf]
      %v686 = vld [vmem:[%s604 + $0x8] sm:$0xf]
      %v687 = vld [vmem:[%s604 + $0xc] sm:$0xf]
      %v688 = vld [vmem:[%s604 + $0x10] sm:$0xf]
      %v689 = vld [vmem:[%s604 + $0x14] sm:$0xf]
      %v690 = vld [vmem:[%s604 + $0x18] sm:$0xf]
      %v691 = vld [vmem:[%s604 + $0x1c] sm:$0xf]
      %v692 = vld [vmem:[%s608] sm:$0x1]
      %v693 = vld [vmem:[%s608 + $0x1] sm:$0x1]
      %v696 = vlaneseq
      %v697 = vshrl.u32 %v696, 7
      %v698 = vsub.s32 0, %v697
      %v699 = vrot.slane %v692, %v698
      %v700 = vlaneseq
      %v701 = vshrl.u32 %v700, 7
      %v702 = vsub.s32 0, %v701
      %v703 = vrot.slane %v693, %v702
      %v710 = vunpack.c.l.b16 %v684
      %v711 = vunpack.c.l.b16 %v685
      %v712 = vunpack.c.l.b16 %v686
      %v713 = vunpack.c.l.b16 %v687
      %v714 = vpack.c.b16 %v711, %v710
      %v715 = vpack.c.b16 %v713, %v712
      %vm718 = vcmask 261120
      %v720 = vsel %vm718, %v683, 0
      %722 = vmatprep.subr.bf16.mxu0 0
      %723 = vmatpush1.bf16.msra.mxu0 %v714
      %724 = vmatprep.subr.bf16.mxu0 0
      %725 = vmatpush1.bf16.msra.mxu0 %v715
      %726 = vmatprep.subr.bf16.mxu0 0
      %727 = vmatpush1.bf16.msra.mxu0 0
      %728 = vmatprep.subr.bf16.mxu0 0
      %729 = vmatpush1.bf16.msra.mxu0 0
      %730 = vmatprep.subr.bf16.mxu0 0
      %731 = vmatpush1.bf16.msra.mxu0 0
      %732 = vmatprep.subr.bf16.mxu0 0
      %733 = vmatpush1.bf16.msra.mxu0 0
      %734 = vmatprep.subr.bf16.mxu0 0
      %735 = vmatpush1.bf16.msra.mxu0 0
      %736 = vmatprep.subr.bf16.mxu0 0
      %737 = vmatpush1.bf16.msra.mxu0 0
      %738 = vmatprep.subr.bf16.mxu0 0
      %739 = vmatpush1.bf16.msra.mxu0 0
      %740 = vmatprep.subr.bf16.mxu0 0
      %741 = vmatpush1.bf16.msra.mxu0 0
      %742 = vmatprep.subr.bf16.mxu0 0
      %743 = vmatpush1.bf16.msra.mxu0 0
      %744 = vmatprep.subr.bf16.mxu0 0
      %745 = vmatpush1.bf16.msra.mxu0 0
      %746 = vmatprep.subr.bf16.mxu0 0
      %747 = vmatpush1.bf16.msra.mxu0 0
      %748 = vmatprep.subr.bf16.mxu0 0
      %749 = vmatpush1.bf16.msra.mxu0 0
      %750 = vmatprep.subr.bf16.mxu0 0
      %751 = vmatpush1.bf16.msra.mxu0 0
      %752 = vmatprep.subr.bf16.mxu0 0
      %753 = vmatpush1.bf16.msra.mxu0 0
      %754 = vmatprep.mubr.bf16.mxu0 0
      %755 = vmatmul.mubr.bf16.gmra.mrb[0].mxu0 %v720
      %v756 = vpop.f32.mrb[0].mxu0
      %v757 = vadd.f32 %v699, %v756
      %v758 = vpop.f32.mrb[0].mxu0
      %v759 = vpop.f32.mrb[0].mxu0
      %v760 = vpop.f32.mrb[0].mxu0
      %761 = vdwg.mxu0
      %v766 = vunpack.c.l.b16 %v688
      %v767 = vunpack.c.l.b16 %v689
      %v768 = vunpack.c.l.b16 %v690
      %v769 = vunpack.c.l.b16 %v691
      %v770 = vpack.c.b16 %v767, %v766
      %v771 = vpack.c.b16 %v769, %v768
      %774 = vmatprep.subr.bf16.mxu0 0
      %775 = vmatpush1.bf16.msra.mxu0 %v770
      %776 = vmatprep.subr.bf16.mxu0 0
      %777 = vmatpush1.bf16.msra.mxu0 %v771
      %778 = vmatprep.subr.bf16.mxu0 0
      %779 = vmatpush1.bf16.msra.mxu0 0
      %780 = vmatprep.subr.bf16.mxu0 0
      %781 = vmatpush1.bf16.msra.mxu0 0
      %782 = vmatprep.subr.bf16.mxu0 0
      %783 = vmatpush1.bf16.msra.mxu0 0
      %784 = vmatprep.subr.bf16.mxu0 0
      %785 = vmatpush1.bf16.msra.mxu0 0
      %786 = vmatprep.subr.bf16.mxu0 0
      %787 = vmatpush1.bf16.msra.mxu0 0
      %788 = vmatprep.subr.bf16.mxu0 0
      %789 = vmatpush1.bf16.msra.mxu0 0
      %790 = vmatprep.subr.bf16.mxu0 0
      %791 = vmatpush1.bf16.msra.mxu0 0
      %792 = vmatprep.subr.bf16.mxu0 0
      %793 = vmatpush1.bf16.msra.mxu0 0
      %794 = vmatprep.subr.bf16.mxu0 0
      %795 = vmatpush1.bf16.msra.mxu0 0
      %796 = vmatprep.subr.bf16.mxu0 0
      %797 = vmatpush1.bf16.msra.mxu0 0
      %798 = vmatprep.subr.bf16.mxu0 0
      %799 = vmatpush1.bf16.msra.mxu0 0
      %800 = vmatprep.subr.bf16.mxu0 0
      %801 = vmatpush1.bf16.msra.mxu0 0
      %802 = vmatprep.subr.bf16.mxu0 0
      %803 = vmatpush1.bf16.msra.mxu0 0
      %804 = vmatprep.subr.bf16.mxu0 0
      %805 = vmatpush1.bf16.msra.mxu0 0
      %806 = vmatprep.mubr.bf16.mxu0 0
      %807 = vmatmul.mubr.bf16.gmra.mrb[0].mxu0 %v720
      %v808 = vpop.f32.mrb[0].mxu0
      %v809 = vadd.f32 %v703, %v808
      %v810 = vpop.f32.mrb[0].mxu0
      %v811 = vpop.f32.mrb[0].mxu0
      %v812 = vpop.f32.mrb[0].mxu0
      %813 = vdwg.mxu0
      %v814 = vpack.c.bf16 %v757, %v757
      %v815 = vpack.c.bf16 %v809, %v809
      %817 = vrot.lane.b32.xlu0 %v814, 112
      %v818 = vpop.permute.xlu0 %817
      %vm819 = vcmask 130048
      %v821 = vsel %vm819, %v814, 0
      %v824 = vsel %vm819, %v818, 0
      %826 = vmatprep.subr.bf16.mxu0 0
      %827 = vmatpush1.bf16.xpose.msra.mxu0 %v824
      %828 = vmatprep.subr.bf16.mxu0 0
      %829 = vmatpush1.bf16.xpose.msra.mxu0 0
      %830 = vmatprep.subr.bf16.mxu0 0
      %831 = vmatpush1.bf16.xpose.msra.mxu0 0
      %832 = vmatprep.subr.bf16.mxu0 0
      %833 = vmatpush1.bf16.xpose.msra.mxu0 0
      %834 = vmatprep.subr.bf16.mxu0 0
      %835 = vmatpush1.bf16.xpose.msra.mxu0 0
      %836 = vmatprep.subr.bf16.mxu0 0
      %837 = vmatpush1.bf16.xpose.msra.mxu0 0
      %838 = vmatprep.subr.bf16.mxu0 0
      %839 = vmatpush1.bf16.xpose.msra.mxu0 0
      %840 = vmatprep.subr.bf16.mxu0 0
      %841 = vmatpush1.bf16.xpose.msra.mxu0 0
      %842 = vmatprep.subr.bf16.mxu0 0
      %843 = vmatpush1.bf16.xpose.msra.mxu0 0
      %844 = vmatprep.subr.bf16.mxu0 0
      %845 = vmatpush1.bf16.xpose.msra.mxu0 0
      %846 = vmatprep.subr.bf16.mxu0 0
      %847 = vmatpush1.bf16.xpose.msra.mxu0 0
      %848 = vmatprep.subr.bf16.mxu0 0
      %849 = vmatpush1.bf16.xpose.msra.mxu0 0
      %850 = vmatprep.subr.bf16.mxu0 0
      %851 = vmatpush1.bf16.xpose.msra.mxu0 0
      %852 = vmatprep.subr.bf16.mxu0 0
      %853 = vmatpush1.bf16.xpose.msra.mxu0 0
      %854 = vmatprep.subr.bf16.mxu0 0
      %855 = vmatpush1.bf16.xpose.msra.mxu0 0
      %856 = vmatprep.subr.bf16.mxu0 0
      %857 = vmatpush1.bf16.xpose.msra.mxu0 0
      %858 = vmatprep.mubr.bf16.mxu0 0
      %859 = vmatmul.mubr.bf16.gmra.mrb[0].mxu0 %v821
      %v860 = vpop.f32.mrb[0].mxu0
      %v861 = vadd.f32 0.0, %v860
      %v862 = vpop.f32.mrb[0].mxu0
      %v863 = vpop.f32.mrb[0].mxu0
      %v864 = vpop.f32.mrb[0].mxu0
      %865 = vdwg.mxu0
      %867 = vrot.lane.b32.xlu0 %v815, 112
      %v868 = vpop.permute.xlu0 %867
      %v870 = vsel %vm819, %v815, 0
      %v873 = vsel %vm819, %v868, 0
      %875 = vmatprep.subr.bf16.mxu0 0
      %876 = vmatpush1.bf16.xpose.msra.mxu0 %v873
      %877 = vmatprep.subr.bf16.mxu0 0
      %878 = vmatpush1.bf16.xpose.msra.mxu0 0
      %879 = vmatprep.subr.bf16.mxu0 0
      %880 = vmatpush1.bf16.xpose.msra.mxu0 0
      %881 = vmatprep.subr.bf16.mxu0 0
      %882 = vmatpush1.bf16.xpose.msra.mxu0 0
      %883 = vmatprep.subr.bf16.mxu0 0
      %884 = vmatpush1.bf16.xpose.msra.mxu0 0
      %885 = vmatprep.subr.bf16.mxu0 0
      %886 = vmatpush1.bf16.xpose.msra.mxu0 0
      %887 = vmatprep.subr.bf16.mxu0 0
      %888 = vmatpush1.bf16.xpose.msra.mxu0 0
      %889 = vmatprep.subr.bf16.mxu0 0
      %890 = vmatpush1.bf16.xpose.msra.mxu0 0
      %891 = vmatprep.subr.bf16.mxu0 0
      %892 = vmatpush1.bf16.xpose.msra.mxu0 0
      %893 = vmatprep.subr.bf16.mxu0 0
      %894 = vmatpush1.bf16.xpose.msra.mxu0 0
      %895 = vmatprep.subr.bf16.mxu0 0
      %896 = vmatpush1.bf16.xpose.msra.mxu0 0
      %897 = vmatprep.subr.bf16.mxu0 0
      %898 = vmatpush1.bf16.xpose.msra.mxu0 0
      %899 = vmatprep.subr.bf16.mxu0 0
      %900 = vmatpush1.bf16.xpose.msra.mxu0 0
      %901 = vmatprep.subr.bf16.mxu0 0
      %902 = vmatpush1.bf16.xpose.msra.mxu0 0
      %903 = vmatprep.subr.bf16.mxu0 0
      %904 = vmatpush1.bf16.xpose.msra.mxu0 0
      %905 = vmatprep.subr.bf16.mxu0 0
      %906 = vmatpush1.bf16.xpose.msra.mxu0 0
      %907 = vmatprep.mubr.bf16.mxu0 0
      %908 = vmatmul.mubr.bf16.gmra.mrb[0].mxu0 %v870
      %v909 = vpop.f32.mrb[0].mxu0
      %v910 = vadd.f32 0.0, %v909
      %v911 = vpop.f32.mrb[0].mxu0
      %v912 = vpop.f32.mrb[0].mxu0
      %v913 = vpop.f32.mrb[0].mxu0
      %914 = vdwg.mxu0
      %v915 = vmul.f32 %v861, 0.25
      %v916 = vmul.f32 %v910, 0.25
      %vm917 = vcmask 36864
      %v918 = vsel %vm917, %v915, -inf
      %919 = vmax.xlane.f32.xlu0 %v918
      %v920 = vpop.xlane.xlu0 %919
      %v921 = vsel %vm917, %v916, -inf
      %922 = vmax.xlane.f32.xlu0 %v921
      %v923 = vpop.xlane.xlu0 %922
      %v924 = vsub.f32 %v915, %v920
      %v925 = vsub.f32 %v916, %v923
      %v926 = vmul.f32 %v924, 1.442695
      %v927 = vpow.pop %v926
      %v928 = vmul.f32 %v925, 1.442695
      %v929 = vpow.pop %v928
      %v930 = vsel %vm917, %v927, 0.0
      %931 = vadd.xlane.f32.xlu0 %v930
      %v932 = vpop.xlane.xlu0 %931
      %v933 = vsel %vm917, %v929, 0.0
      %934 = vadd.xlane.f32.xlu0 %v933
      %v935 = vpop.xlane.xlu0 %934
      %v936 = vrcp.pop %v932
      %v937 = vrcp.pop %v935
      %v938 = vmul.f32 %v927, %v936
      %v939 = vmul.f32 %v929, %v937
      %v940 = vpack.c.bf16 %v938, %v938
      %v941 = vpack.c.bf16 %v939, %v939
      %942 = vrot.lane.b32.xlu0 %v814, 96
      %v943 = vpop.permute.xlu0 %942
      %vm944 = vcmask 39936
      %v946 = vsel %vm944, %v940, 0
      %vm948 = vcmask 1041408
      %vm949 = vcmask 1042432
      %v950 = vsel %vm948, 4294967295, 65535
      %v951 = vsel %vm949, %v950, 0
      %v953 = vand.u32 %v943, %v951
      %955 = vmatprep.subr.bf16.mxu0 0
      %956 = vmatpush1.bf16.msra.mxu0 %v953
      %957 = vmatprep.subr.bf16.mxu0 0
      %958 = vmatpush1.bf16.msra.mxu0 0
      %959 = vmatprep.subr.bf16.mxu0 0
      %960 = vmatpush1.bf16.msra.mxu0 0
      %961 = vmatprep.subr.bf16.mxu0 0
      %962 = vmatpush1.bf16.msra.mxu0 0
      %963 = vmatprep.subr.bf16.mxu0 0
      %964 = vmatpush1.bf16.msra.mxu0 0
      %965 = vmatprep.subr.bf16.mxu0 0
      %966 = vmatpush1.bf16.msra.mxu0 0
      %967 = vmatprep.subr.bf16.mxu0 0
      %968 = vmatpush1.bf16.msra.mxu0 0
      %969 = vmatprep.subr.bf16.mxu0 0
      %970 = vmatpush1.bf16.msra.mxu0 0
      %971 = vmatprep.subr.bf16.mxu0 0
      %972 = vmatpush1.bf16.msra.mxu0 0
      %973 = vmatprep.subr.bf16.mxu0 0
      %974 = vmatpush1.bf16.msra.mxu0 0
      %975 = vmatprep.subr.bf16.mxu0 0
      %976 = vmatpush1.bf16.msra.mxu0 0
      %977 = vmatprep.subr.bf16.mxu0 0
      %978 = vmatpush1.bf16.msra.mxu0 0
      %979 = vmatprep.subr.bf16.mxu0 0
      %980 = vmatpush1.bf16.msra.mxu0 0
      %981 = vmatprep.subr.bf16.mxu0 0
      %982 = vmatpush1.bf16.msra.mxu0 0
      %983 = vmatprep.subr.bf16.mxu0 0
      %984 = vmatpush1.bf16.msra.mxu0 0
      %985 = vmatprep.subr.bf16.mxu0 0
      %986 = vmatpush1.bf16.msra.mxu0 0
      %987 = vmatprep.mubr.bf16.mxu0 0
      %988 = vmatmul.mubr.bf16.gmra.mrb[0].mxu0 %v946
      %v989 = vpop.f32.mrb[0].mxu0
      %v990 = vadd.f32 0.0, %v989
      %v991 = vpop.f32.mrb[0].mxu0
      %v992 = vpop.f32.mrb[0].mxu0
      %v993 = vpop.f32.mrb[0].mxu0
      %994 = vdwg.mxu0
      %995 = vrot.lane.b32.xlu0 %v815, 96
      %v996 = vpop.permute.xlu0 %995
      %v998 = vsel %vm944, %v941, 0
      %v1001 = vand.u32 %v996, %v951
      %1003 = vmatprep.subr.bf16.mxu0 0
      %1004 = vmatpush1.bf16.msra.mxu0 %v1001
      %1005 = vmatprep.subr.bf16.mxu0 0
      %1006 = vmatpush1.bf16.msra.mxu0 0
      %1007 = vmatprep.subr.bf16.mxu0 0
      %1008 = vmatpush1.bf16.msra.mxu0 0
      %1009 = vmatprep.subr.bf16.mxu0 0
      %1010 = vmatpush1.bf16.msra.mxu0 0
      %1011 = vmatprep.subr.bf16.mxu0 0
      %1012 = vmatpush1.bf16.msra.mxu0 0
      %1013 = vmatprep.subr.bf16.mxu0 0
      %1014 = vmatpush1.bf16.msra.mxu0 0
      %1015 = vmatprep.subr.bf16.mxu0 0
      %1016 = vmatpush1.bf16.msra.mxu0 0
      %1017 = vmatprep.subr.bf16.mxu0 0
      %1018 = vmatpush1.bf16.msra.mxu0 0
      %1019 = vmatprep.subr.bf16.mxu0 0
      %1020 = vmatpush1.bf16.msra.mxu0 0
      %1021 = vmatprep.subr.bf16.mxu0 0
      %1022 = vmatpush1.bf16.msra.mxu0 0
      %1023 = vmatprep.subr.bf16.mxu0 0
      %1024 = vmatpush1.bf16.msra.mxu0 0
      %1025 = vmatprep.subr.bf16.mxu0 0
      %1026 = vmatpush1.bf16.msra.mxu0 0
      %1027 = vmatprep.subr.bf16.mxu0 0
      %1028 = vmatpush1.bf16.msra.mxu0 0
      %1029 = vmatprep.subr.bf16.mxu0 0
      %1030 = vmatpush1.bf16.msra.mxu0 0
      %1031 = vmatprep.subr.bf16.mxu0 0
      %1032 = vmatpush1.bf16.msra.mxu0 0
      %1033 = vmatprep.subr.bf16.mxu0 0
      %1034 = vmatpush1.bf16.msra.mxu0 0
      %1035 = vmatprep.mubr.bf16.mxu0 0
      %1036 = vmatmul.mubr.bf16.gmra.mrb[0].mxu0 %v998
      %v1037 = vpop.f32.mrb[0].mxu0
      %v1038 = vadd.f32 0.0, %v1037
      %v1039 = vpop.f32.mrb[0].mxu0
      %v1040 = vpop.f32.mrb[0].mxu0
      %v1041 = vpop.f32.mrb[0].mxu0
      %1042 = vdwg.mxu0
      %v1043 = vpack.c.bf16 %v990, %v990
      %v1044 = vpack.c.bf16 %v1038, %v1038
      %v1045 = vld [vmem:[%s613] sm:$0xf]
      %v1046 = vld [vmem:[%s613 + $0x4] sm:$0xf]
      %v1047 = vld [vmem:[%s613 + $0x8] sm:$0xf]
      %v1048 = vld [vmem:[%s613 + $0xc] sm:$0xf]
      %v1051 = vunpack.c.l.b16 %v1045
      %v1052 = vunpack.c.l.b16 %v1046
      %v1053 = vpack.c.b16 %v1052, %v1051
      %v1056 = vsel %vm819, %v1043, 0
      %1058 = vmatprep.subr.bf16.mxu0 0
      %1059 = vmatpush1.bf16.msra.mxu0 %v1053
      %1060 = vmatprep.subr.bf16.mxu0 0
      %1061 = vmatpush1.bf16.msra.mxu0 0
      %1062 = vmatprep.subr.bf16.mxu0 0
      %1063 = vmatpush1.bf16.msra.mxu0 0
      %1064 = vmatprep.subr.bf16.mxu0 0
      %1065 = vmatpush1.bf16.msra.mxu0 0
      %1066 = vmatprep.subr.bf16.mxu0 0
      %1067 = vmatpush1.bf16.msra.mxu0 0
      %1068 = vmatprep.subr.bf16.mxu0 0
      %1069 = vmatpush1.bf16.msra.mxu0 0
      %1070 = vmatprep.subr.bf16.mxu0 0
      %1071 = vmatpush1.bf16.msra.mxu0 0
      %1072 = vmatprep.subr.bf16.mxu0 0
      %1073 = vmatpush1.bf16.msra.mxu0 0
      %1074 = vmatprep.subr.bf16.mxu0 0
      %1075 = vmatpush1.bf16.msra.mxu0 0
      %1076 = vmatprep.subr.bf16.mxu0 0
      %1077 = vmatpush1.bf16.msra.mxu0 0
      %1078 = vmatprep.subr.bf16.mxu0 0
      %1079 = vmatpush1.bf16.msra.mxu0 0
      %1080 = vmatprep.subr.bf16.mxu0 0
      %1081 = vmatpush1.bf16.msra.mxu0 0
      %1082 = vmatprep.subr.bf16.mxu0 0
      %1083 = vmatpush1.bf16.msra.mxu0 0
      %1084 = vmatprep.subr.bf16.mxu0 0
      %1085 = vmatpush1.bf16.msra.mxu0 0
      %1086 = vmatprep.subr.bf16.mxu0 0
      %1087 = vmatpush1.bf16.msra.mxu0 0
      %1088 = vmatprep.subr.bf16.mxu0 0
      %1089 = vmatpush1.bf16.msra.mxu0 0
      %1090 = vmatprep.mubr.bf16.mxu0 0
      %1091 = vmatmul.mubr.bf16.gmra.mrb[0].mxu0 %v1056
      %v1092 = vpop.f32.mrb[0].mxu0
      %v1093 = vadd.f32 0.0, %v1092
      %v1094 = vpop.f32.mrb[0].mxu0
      %v1095 = vpop.f32.mrb[0].mxu0
      %v1096 = vpop.f32.mrb[0].mxu0
      %1097 = vdwg.mxu0
      %v1100 = vunpack.c.l.b16 %v1047
      %v1101 = vunpack.c.l.b16 %v1048
      %v1102 = vpack.c.b16 %v1101, %v1100
      %v1105 = vsel %vm819, %v1044, 0
      %1107 = vmatprep.subr.bf16.mxu0 0
      %1108 = vmatpush1.bf16.msra.mxu0 %v1102
      %1109 = vmatprep.subr.bf16.mxu0 0
      %1110 = vmatpush1.bf16.msra.mxu0 0
      %1111 = vmatprep.subr.bf16.mxu0 0
      %1112 = vmatpush1.bf16.msra.mxu0 0
      %1113 = vmatprep.subr.bf16.mxu0 0
      %1114 = vmatpush1.bf16.msra.mxu0 0
      %1115 = vmatprep.subr.bf16.mxu0 0
      %1116 = vmatpush1.bf16.msra.mxu0 0
      %1117 = vmatprep.subr.bf16.mxu0 0
      %1118 = vmatpush1.bf16.msra.mxu0 0
      %1119 = vmatprep.subr.bf16.mxu0 0
      %1120 = vmatpush1.bf16.msra.mxu0 0
      %1121 = vmatprep.subr.bf16.mxu0 0
      %1122 = vmatpush1.bf16.msra.mxu0 0
      %1123 = vmatprep.subr.bf16.mxu0 0
      %1124 = vmatpush1.bf16.msra.mxu0 0
      %1125 = vmatprep.subr.bf16.mxu0 0
      %1126 = vmatpush1.bf16.msra.mxu0 0
      %1127 = vmatprep.subr.bf16.mxu0 0
      %1128 = vmatpush1.bf16.msra.mxu0 0
      %1129 = vmatprep.subr.bf16.mxu0 0
      %1130 = vmatpush1.bf16.msra.mxu0 0
      %1131 = vmatprep.subr.bf16.mxu0 0
      %1132 = vmatpush1.bf16.msra.mxu0 0
      %1133 = vmatprep.subr.bf16.mxu0 0
      %1134 = vmatpush1.bf16.msra.mxu0 0
      %1135 = vmatprep.subr.bf16.mxu0 0
      %1136 = vmatpush1.bf16.msra.mxu0 0
      %1137 = vmatprep.subr.bf16.mxu0 0
      %1138 = vmatpush1.bf16.msra.mxu0 0
      %1139 = vmatprep.mubr.bf16.mxu0 0
      %1140 = vmatmul.mubr.bf16.gmra.mrb[0].mxu0 %v1105
      %v1141 = vpop.f32.mrb[0].mxu0
      %v1142 = vadd.f32 0.0, %v1141
      %v1143 = vpop.f32.mrb[0].mxu0
      %v1144 = vpop.f32.mrb[0].mxu0
      %v1145 = vpop.f32.mrb[0].mxu0
      %1146 = vdwg.mxu0
      %v1147 = vsel %vm654, %v1093, 0.0
      %v1148 = vsel %vm654, %v1142, 0.0
      %v1149 = vadd.f32 %v1147, %v1148
      %v1150 = vld [vmem:[%s616] sm:$0x1]
      %v1152 = vlaneseq
      %v1153 = vshrl.u32 %v1152, 7
      %v1154 = vsub.s32 0, %v1153
      %v1155 = vrot.slane %v1150, %v1154
      %v1157 = vadd.f32 %v1149, %v1155
      %v1158 = vadd.f32 %v651, %v1157
      %v1159 = vld [vmem:[%s619] sm:$0x1]
      %v1160 = vld [vmem:[%s622] sm:$0x1]
      %v1161 = vsel %vm654, %v1158, 0.0
      %1162 = vadd.xlane.f32.xlu0 %v1161
      %v1163 = vpop.xlane.xlu0 %1162
      %v1164 = vmul.f32 %v1163, %v658
      %v1165 = vsub.f32 %v1158, %v1164
      %v1166 = vmul.f32 %v1165, %v1165
      %v1167 = vsel %vm654, %v1166, 0.0
      %1168 = vadd.xlane.f32.xlu0 %v1167
      %v1169 = vpop.xlane.xlu0 %1168
      %v1170 = vmul.f32 %v1169, %v658
      %v1171 = vadd.f32 %v1170, 1e-06
      %v1172 = vrsqrt.pop %v1171
      %v1173 = vmul.f32 %v1165, %v1172
      %v1175 = vlaneseq
      %v1176 = vshrl.u32 %v1175, 7
      %v1177 = vsub.s32 0, %v1176
      %v1178 = vrot.slane %v1159, %v1177
      %v1180 = vmul.f32 %v1173, %v1178
      %v1182 = vlaneseq
      %v1183 = vshrl.u32 %v1182, 7
      %v1184 = vsub.s32 0, %v1183
      %v1185 = vrot.slane %v1160, %v1184
      %v1187 = vadd.f32 %v1180, %v1185
      %v1188 = vpack.c.bf16 %v1187, %v1187
      %v1189 = vld [vmem:[%s627] sm:$0xf]
      %v1190 = vld [vmem:[%s627 + $0x4] sm:$0xf]
      %v1191 = vld [vmem:[%s627 + $0x8] sm:$0xf]
      %v1192 = vld [vmem:[%s627 + $0xc] sm:$0xf]
      %v1193 = vld [vmem:[%s630] sm:$0x1]
      %v1195 = vlaneseq
      %v1196 = vshrl.u32 %v1195, 7
      %v1197 = vsub.s32 0, %v1196
      %v1198 = vrot.slane %v1193, %v1197
      %v1204 = vunpack.c.l.b16 %v1189
      %v1205 = vunpack.c.l.b16 %v1190
      %v1206 = vunpack.c.l.b16 %v1191
      %v1207 = vunpack.c.l.b16 %v1192
      %v1208 = vpack.c.b16 %v1205, %v1204
      %v1209 = vpack.c.b16 %v1207, %v1206
      %v1213 = vsel %vm718, %v1188, 0
      %1215 = vmatprep.subr.bf16.mxu0 0
      %1216 = vmatpush1.bf16.msra.mxu0 %v1208
      %1217 = vmatprep.subr.bf16.mxu0 0
      %1218 = vmatpush1.bf16.msra.mxu0 %v1209
      %1219 = vmatprep.subr.bf16.mxu0 0
      %1220 = vmatpush1.bf16.msra.mxu0 0
      %1221 = vmatprep.subr.bf16.mxu0 0
      %1222 = vmatpush1.bf16.msra.mxu0 0
      %1223 = vmatprep.subr.bf16.mxu0 0
      %1224 = vmatpush1.bf16.msra.mxu0 0
      %1225 = vmatprep.subr.bf16.mxu0 0
      %1226 = vmatpush1.bf16.msra.mxu0 0
      %1227 = vmatprep.subr.bf16.mxu0 0
      %1228 = vmatpush1.bf16.msra.mxu0 0
      %1229 = vmatprep.subr.bf16.mxu0 0
      %1230 = vmatpush1.bf16.msra.mxu0 0
      %1231 = vmatprep.subr.bf16.mxu0 0
      %1232 = vmatpush1.bf16.msra.mxu0 0
      %1233 = vmatprep.subr.bf16.mxu0 0
      %1234 = vmatpush1.bf16.msra.mxu0 0
      %1235 = vmatprep.subr.bf16.mxu0 0
      %1236 = vmatpush1.bf16.msra.mxu0 0
      %1237 = vmatprep.subr.bf16.mxu0 0
      %1238 = vmatpush1.bf16.msra.mxu0 0
      %1239 = vmatprep.subr.bf16.mxu0 0
      %1240 = vmatpush1.bf16.msra.mxu0 0
      %1241 = vmatprep.subr.bf16.mxu0 0
      %1242 = vmatpush1.bf16.msra.mxu0 0
      %1243 = vmatprep.subr.bf16.mxu0 0
      %1244 = vmatpush1.bf16.msra.mxu0 0
      %1245 = vmatprep.subr.bf16.mxu0 0
      %1246 = vmatpush1.bf16.msra.mxu0 0
      %1247 = vmatprep.mubr.bf16.mxu0 0
      %1248 = vmatmul.mubr.bf16.gmra.mrb[0].mxu0 %v1213
      %v1249 = vpop.f32.mrb[0].mxu0
      %v1250 = vadd.f32 %v1198, %v1249
      %v1251 = vpop.f32.mrb[0].mxu0
      %v1252 = vpop.f32.mrb[0].mxu0
      %v1253 = vpop.f32.mrb[0].mxu0
      %1254 = vdwg.mxu0
      %v1255 = vmul.f32 %v1250, 0.5
      %v1256 = vmul.f32 %v1250, 0.044715
      %v1257 = vmul.f32 %v1256, %v1250
      %v1258 = vmul.f32 %v1257, %v1250
      %v1259 = vadd.f32 %v1250, %v1258
      %v1260 = vmul.f32 %v1259, 0.7978846
      %v1261 = vtanh.pop %v1260
      %v1262 = vadd.f32 %v1261, 1.0
      %v1263 = vmul.f32 %v1255, %v1262
      %v1264 = vpack.c.bf16 %v1263, %v1263
      %v1265 = vld [vmem:[%s635] sm:$0xf]
      %v1266 = vld [vmem:[%s635 + $0x4] sm:$0xf]
      %v1267 = vld [vmem:[%s635 + $0x8] sm:$0xf]
      %v1268 = vld [vmem:[%s635 + $0xc] sm:$0xf]
      %v1269 = vld [vmem:[%s635 + $0x10] sm:$0xf]
      %v1270 = vld [vmem:[%s635 + $0x14] sm:$0xf]
      %v1271 = vld [vmem:[%s635 + $0x18] sm:$0xf]
      %v1272 = vld [vmem:[%s635 + $0x1c] sm:$0xf]
      %v1273 = vld [vmem:[%s638] sm:$0x1]
      %v1275 = vlaneseq
      %v1276 = vshrl.u32 %v1275, 7
      %v1277 = vsub.s32 0, %v1276
      %v1278 = vrot.slane %v1273, %v1277
      %v1288 = vunpack.c.l.b16 %v1265
      %v1289 = vunpack.c.l.b16 %v1266
      %v1290 = vunpack.c.l.b16 %v1267
      %v1291 = vunpack.c.l.b16 %v1268
      %v1292 = vunpack.c.l.b16 %v1269
      %v1293 = vunpack.c.l.b16 %v1270
      %v1294 = vunpack.c.l.b16 %v1271
      %v1295 = vunpack.c.l.b16 %v1272
      %v1296 = vpack.c.b16 %v1289, %v1288
      %v1297 = vpack.c.b16 %v1291, %v1290
      %v1298 = vpack.c.b16 %v1293, %v1292
      %v1299 = vpack.c.b16 %v1295, %v1294
      %vm1304 = vcmask 523264
      %v1306 = vsel %vm1304, %v1264, 0
      %1308 = vmatprep.subr.bf16.mxu0 0
      %1309 = vmatpush1.bf16.msra.mxu0 %v1296
      %1310 = vmatprep.subr.bf16.mxu0 0
      %1311 = vmatpush1.bf16.msra.mxu0 %v1297
      %1312 = vmatprep.subr.bf16.mxu0 0
      %1313 = vmatpush1.bf16.msra.mxu0 %v1298
      %1314 = vmatprep.subr.bf16.mxu0 0
      %1315 = vmatpush1.bf16.msra.mxu0 %v1299
      %1316 = vmatprep.subr.bf16.mxu0 0
      %1317 = vmatpush1.bf16.msra.mxu0 0
      %1318 = vmatprep.subr.bf16.mxu0 0
      %1319 = vmatpush1.bf16.msra.mxu0 0
      %1320 = vmatprep.subr.bf16.mxu0 0
      %1321 = vmatpush1.bf16.msra.mxu0 0
      %1322 = vmatprep.subr.bf16.mxu0 0
      %1323 = vmatpush1.bf16.msra.mxu0 0
      %1324 = vmatprep.subr.bf16.mxu0 0
      %1325 = vmatpush1.bf16.msra.mxu0 0
      %1326 = vmatprep.subr.bf16.mxu0 0
      %1327 = vmatpush1.bf16.msra.mxu0 0
      %1328 = vmatprep.subr.bf16.mxu0 0
      %1329 = vmatpush1.bf16.msra.mxu0 0
      %1330 = vmatprep.subr.bf16.mxu0 0
      %1331 = vmatpush1.bf16.msra.mxu0 0
      %1332 = vmatprep.subr.bf16.mxu0 0
      %1333 = vmatpush1.bf16.msra.mxu0 0
      %1334 = vmatprep.subr.bf16.mxu0 0
      %1335 = vmatpush1.bf16.msra.mxu0 0
      %1336 = vmatprep.subr.bf16.mxu0 0
      %1337 = vmatpush1.bf16.msra.mxu0 0
      %1338 = vmatprep.subr.bf16.mxu0 0
      %1339 = vmatpush1.bf16.msra.mxu0 0
      %1340 = vmatprep.mubr.bf16.mxu0 0
      %1341 = vmatmul.mubr.bf16.gmra.mrb[0].mxu0 %v1306
      %v1342 = vpop.f32.mrb[0].mxu0
      %v1343 = vadd.f32 %v1278, %v1342
      %v1344 = vpop.f32.mrb[0].mxu0
      %v1345 = vpop.f32.mrb[0].mxu0
      %v1346 = vpop.f32.mrb[0].mxu0
      %1347 = vdwg.mxu0
      %v1348 = vadd.f32 %v1158, %v1343
      %1349 = vst.msk [vmem:[#allocation2] sm:$0x1f] %vm654, %v1348
      %p1350 = scmp.eq.s32.totalorder %s29, 1
      // Predicated region
      $region77: #{vit_forward.4} parent=71 // pred_check
        %p1351 = pneg %p1350
      $region78: #{vit_forward.4} parent=71 // pred_check_branch
        %1353 = sbr.rel (%p1351) target = $region80
      $region79: #{vit_forward.4} parent=71 // pred_region
        %1354 = vst.msk [vmem:[%s642] sm:$0x1f] %vm654, %v1348
      $region80: #{vit_forward.4} parent=71 // pred_fallthru
        _
      %p1355 = scmp.lt.s32.totalorder %s28, 1
      %s1356 = scalar_select %p1355, %s28, 1
      %s1357 = smul.addr %s1356, 8
      %s1358 = scalar_lea.vmem %s13, %s1357
      // Predicated region
      $region81: #{vit_forward.4} parent=71 // pred_check
        %p1359 = pneg %p392
      $region82: #{vit_forward.4} parent=71 // pred_check_branch
        %1361 = sbr.rel (%p1359) target = $region84
      $region83: #{vit_forward.4} parent=71 // pred_region
        _
      $region84: #{vit_forward.4} parent=71 // pred_fallthru
        _
    $region72: #{vit_forward.4} parent=5 // pred_fallthru
      _
    %p1362 = scmp.le.s32.totalorder 2, %s19
    // Predicated region
    $region85: #{vit_forward.4} parent=5 // pred_check
      %p1363 = pneg %p1362
    $region86: #{vit_forward.4} parent=5 // pred_check_branch
      %1365 = sbr.rel (%p1363) target = $region88
    $region87: #{vit_forward.4} parent=5 // pred_region
      %s1366 = ssub.s32 %s19, 2
      // Predicated region
      $region89: #{vit_forward.4} parent=87 // pred_check
        %p1367 = pneg %p398
      $region90: #{vit_forward.4} parent=87 // pred_check_branch
        %1369 = sbr.rel (%p1367) target = $region92
      $region91: #{vit_forward.4} parent=87 // pred_region
        %p1370 = scmp.lt.s32.totalorder %s30, 1
        %s1371 = scalar_select %p1370, %s30, 1
        %s1372 = smul.addr %s1371, 8
        %s1373 = scalar_lea.vmem %s13, %s1372
      $region92: #{vit_forward.4} parent=87 // pred_fallthru
        _
    $region88: #{vit_forward.4} parent=5 // pred_fallthru
      _
  $region6: #{vit_forward.4} parent=0 // loop_footer
    %s23 = sadd.s32 1, %s19
  $region7: #{vit_forward.4} parent=0 // loop_footer_branch
    %18 = sbr.rel target = $region3
  $region8: #{vit_forward.4} parent=0 // loop_exit
    _

</llo_original>
